<compile_context>
chip_gen: v7x
topology: tpu7x:2x2x1
jax: 0.10.0
libtpu: 0.0.40
codegen_flags: <defaults>
</compile_context>

<pallas_src>
import jax
import jax.numpy as jnp
from jax import lax
from jax.experimental import pallas as pl
from jax.experimental.pallas import tpu as pltpu

BN_EPS = 1e-5  # nn.BatchNorm2d default


# ---------------------------------------------------------------------------
# In-kernel helpers
# ---------------------------------------------------------------------------
def _shift_lanes(x, s):
    """y[..., q] = x[..., q + s] (wrapped positions are don't-care; caller masks).

    Written as an explicit lane rotation (slice + concat) so the semantics are
    unambiguous; boundary pixels that would read across image seams are zeroed
    by the caller's validity mask.
    """
    if s == 0:
        return x
    n = x.shape[-1]
    k = s % n
    return jnp.concatenate([x[:, k:], x[:, :k]], axis=1)


def _im2col_taps(x, row, col, H, W):
    """Build the transposed im2col patch for a 3x3 / pad-1 / stride-1 conv.

    x:        (C, Mt)   activations, Mt = Bt*H*W (whole images, image-major)
    row, col: (1, Mt)   int32 per-pixel spatial indices (periodic per image)
    returns:  (9*C, Mt) rows ordered (kh, kw, cin)
    """
    taps = []
    for di in (-1, 0, 1):
        for dj in (-1, 0, 1):
            if di == 0 and dj == 0:
                taps.append(x)
                continue
            shifted = _shift_lanes(x, di * W + dj)
            r = row + di
            c = col + dj
            valid = (r >= 0) & (r < H) & (c >= 0) & (c < W)
            taps.append(jnp.where(valid, shifted, jnp.zeros_like(shifted)))
    return jnp.concatenate(taps, axis=0)


def _make_fused_block_kernel(H, W):
    """conv1+bn1+relu -> conv2+bn2 + identity residual + relu, all in VMEM."""

    def kernel(x_ref, row_ref, col_ref, w1_ref, s1_ref, t1_ref,
               w2_ref, s2_ref, t2_ref, o_ref):
        x = x_ref[...]                       # (Cin, Mt), lane-dense
        row = row_ref[...]                   # (1, Mt) int32
        col = col_ref[...]

        # conv1 + folded bn1 + relu : one K=9*Cin MXU matmul.
        patch1 = _im2col_taps(x, row, col, H, W)
        acc1 = jnp.dot(w1_ref[...], patch1, preferred_element_type=jnp.float32)
        y1 = jnp.maximum(acc1 * s1_ref[...] + t1_ref[...], 0.0)

        # conv2 + folded bn2 + residual + relu (intermediate stays on-chip).
        patch2 = _im2col_taps(y1.astype(x.dtype), row, col, H, W)
        acc2 = jnp.dot(w2_ref[...], patch2, preferred_element_type=jnp.float32)
        y2 = acc2 * s2_ref[...] + t2_ref[...] + x.astype(jnp.float32)
        o_ref[...] = jnp.maximum(y2, 0.0).astype(o_ref.dtype)

    return kernel


def _make_conv_bn_kernel(H, W, relu, has_residual):
    """Single fused conv3x3 + folded BN (+ residual) (+ relu) kernel."""

    def kernel(x_ref, row_ref, col_ref, w_ref, s_ref, t_ref, *rest):
        if has_residual:
            res_ref, o_ref = rest
        else:
            (o_ref,) = rest
        x = x_ref[...]
        patch = _im2col_taps(x, row_ref[...], col_ref[...], H, W)
        acc = jnp.dot(w_ref[...], patch, preferred_element_type=jnp.float32)
        y = acc * s_ref[...] + t_ref[...]
        if has_residual:
            y = y + res_ref[...].astype(jnp.float32)
        if relu:
            y = jnp.maximum(y, 0.0)
        o_ref[...] = y.astype(o_ref.dtype)

    return kernel


# ---------------------------------------------------------------------------
# Host-side layout / tiling helpers
# ---------------------------------------------------------------------------
def _pick_batch_tile(B, P):
    """Largest Bt that divides B, keeps blocks lane-aligned (Bt*P % 128 == 0),
    keeps the grid >= 2 steps when B >= 2 (v7x 2-TC split), and bounds VMEM."""
    limit = min(8, max(1, B // 2)) if B >= 2 else 1
    for bt in range(limit, 0, -1):
        if B % bt == 0 and (bt * P) % 128 == 0 and bt * P <= 8192:
            return bt
    return B  # single block spanning the whole batch (block == full extent)


def _pixel_rc(B, H, W):
    p = jnp.arange(H * W, dtype=jnp.int32)
    row = jnp.tile(p // W, (B,)).reshape(1, B * H * W)
    col = jnp.tile(p % W, (B,)).reshape(1, B * H * W)
    return row, col


def _nchw_to_cbp(x):
    B, C, H, W = x.shape
    return jnp.transpose(x, (1, 0, 2, 3)).reshape(C, B * H * W)


def _cbp_to_nchw(x, B, H, W):
    C = x.shape[0]
    return jnp.transpose(x.reshape(C, B, H, W), (1, 0, 2, 3))


# ---------------------------------------------------------------------------
# pallas_call wrappers
# ---------------------------------------------------------------------------
def fused_basic_block(x_cbp, w1, s1, t1, w2, s2, t2, *, B, H, W):
    """Whole BasicBlock (stride 1, identity shortcut) in one pallas_call.

    x_cbp: (Cin, B*H*W);  w1: (planes, 9*Cin);  w2: (planes, 9*planes)
    """
    c_in, n = x_cbp.shape
    planes = w1.shape[0]
    P = H * W
    assert n == B * P
    bt = _pick_batch_tile(B, P)
    mt = bt * P
    row, col = _pixel_rc(B, H, W)

    blk = lambda r: pl.BlockSpec((r, mt), lambda b: (0, b))
    const = lambda shape: pl.BlockSpec(shape, lambda b: (0, 0))

    flops = 2 * B * P * planes * 9 * (c_in + planes)
    bytes_accessed = 4 * (x_cbp.size + planes * n + w1.size + w2.size) + 8 * n

    return pl.pallas_call(
        _make_fused_block_kernel(H, W),
        out_shape=jax.ShapeDtypeStruct((planes, n), x_cbp.dtype),
        grid_spec=pltpu.PrefetchScalarGridSpec(
            num_scalar_prefetch=0,
            grid=(B // bt,),
            in_specs=[
                blk(c_in),                    # x (also the identity residual)
                blk(1),                       # per-pixel row index
                blk(1),                       # per-pixel col index
                const((planes, 9 * c_in)),    # w1 (im2col layout)
                const((planes, 1)),           # bn1 scale
                const((planes, 1)),           # bn1 shift
                const((planes, 9 * planes)),  # w2
                const((planes, 1)),           # bn2 scale
                const((planes, 1)),           # bn2 shift
            ],
            out_specs=blk(planes),
        ),
        compiler_params=pltpu.CompilerParams(dimension_semantics=("parallel",)),
        cost_estimate=pl.CostEstimate(flops=flops, transcendentals=0,
                                      bytes_accessed=bytes_accessed),
    )(x_cbp, row, col,
      w1, s1.reshape(planes, 1).astype(jnp.float32), t1.reshape(planes, 1).astype(jnp.float32),
      w2, s2.reshape(planes, 1).astype(jnp.float32), t2.reshape(planes, 1).astype(jnp.float32))


def conv3x3_bn_act(x_cbp, w, scale, shift, *, B, H, W, residual=None, relu=True):
    """Single fused conv3x3 + folded BN (+ residual) (+ relu), (C, B*H*W) layout."""
    c_in, n = x_cbp.shape
    c_out = w.shape[0]
    P = H * W
    assert n == B * P
    bt = _pick_batch_tile(B, P)
    mt = bt * P
    row, col = _pixel_rc(B, H, W)

    blk = lambda r: pl.BlockSpec((r, mt), lambda b: (0, b))
    const = lambda shape: pl.BlockSpec(shape, lambda b: (0, 0))

    in_specs = [blk(c_in), blk(1), blk(1), const((c_out, 9 * c_in)),
                const((c_out, 1)), const((c_out, 1))]
    args = [x_cbp, row, col, w,
            scale.reshape(c_out, 1).astype(jnp.float32),
            shift.reshape(c_out, 1).astype(jnp.float32)]
    if residual is not None:
        in_specs.append(blk(c_out))
        args.append(residual)

    flops = 2 * B * P * c_out * 9 * c_in
    bytes_accessed = 4 * (x_cbp.size + c_out * n + w.size) + 8 * n

    return pl.pallas_call(
        _make_conv_bn_kernel(H, W, relu, residual is not None),
        out_shape=jax.ShapeDtypeStruct((c_out, n), x_cbp.dtype),
        grid_spec=pltpu.PrefetchScalarGridSpec(
            num_scalar_prefetch=0,
            grid=(B // bt,),
            in_specs=in_specs,
            out_specs=blk(c_out),
        ),
        compiler_params=pltpu.CompilerParams(dimension_semantics=("parallel",)),
        cost_estimate=pl.CostEstimate(flops=flops, transcendentals=0,
                                      bytes_accessed=bytes_accessed),
    )(*args)


# ---------------------------------------------------------------------------
# BasicBlock module (forward pass, eval-mode BN)
# ---------------------------------------------------------------------------
class BasicBlock:
    expansion = 1

    def __init__(self, in_planes, planes, stride=1, option="A", *, key=None,
                 dtype=jnp.float32):
        if key is None:
            key = jax.random.PRNGKey(0)
        k1, k2, k3, k4, k5, k6 = jax.random.split(key, 6)

        # Conv weights in torch's OIHW layout.
        self.w1 = jax.random.normal(k1, (planes, in_planes, 3, 3), dtype) * (2.0 / (in_planes * 9)) ** 0.5
        self.w2 = jax.random.normal(k2, (planes, planes, 3, 3), dtype) * (2.0 / (planes * 9)) ** 0.5

        # Eval-mode BatchNorm parameters (running stats).
        self.bn1_gamma = 1.0 + 0.1 * jax.random.normal(k3, (planes,), dtype)
        self.bn1_beta = 0.1 * jax.random.normal(k4, (planes,), dtype)
        self.bn1_mean = jnp.zeros((planes,), dtype)
        self.bn1_var = jnp.ones((planes,), dtype)
        self.bn2_gamma = 1.0 + 0.1 * jax.random.normal(k5, (planes,), dtype)
        self.bn2_beta = 0.1 * jax.random.normal(k6, (planes,), dtype)
        self.bn2_mean = jnp.zeros((planes,), dtype)
        self.bn2_var = jnp.ones((planes,), dtype)

        self.in_planes = in_planes
        self.planes = planes
        self.stride = stride
        self.option = option

    @staticmethod
    def _fold_bn(gamma, beta, mean, var, eps=BN_EPS):
        scale = gamma / jnp.sqrt(var + eps)
        return scale, beta - mean * scale

    @staticmethod
    def _w_mat(w_oihw):
        # (Cout, Cin, 3, 3) -> (Cout, 9*Cin), columns ordered (kh, kw, cin).
        co, ci, kh, kw = w_oihw.shape
        return jnp.transpose(w_oihw, (0, 2, 3, 1)).reshape(co, kh * kw * ci)

    def __call__(self, x_nchw):
        B, C, H, W = x_nchw.shape
        s1, t1 = self._fold_bn(self.bn1_gamma, self.bn1_beta, self.bn1_mean, self.bn1_var)
        s2, t2 = self._fold_bn(self.bn2_gamma, self.bn2_beta, self.bn2_mean, self.bn2_var)
        w1m = self._w_mat(self.w1)
        w2m = self._w_mat(self.w2)

        x_cbp = _nchw_to_cbp(x_nchw)   # layout glue only

        if self.stride == 1 and self.in_planes == self.planes:
            out = fused_basic_block(x_cbp, w1m, s1, t1, w2m, s2, t2, B=B, H=H, W=W)
            return _cbp_to_nchw(out, B, H, W)

        # Downsampling / channel-changing block (option A shortcut).
        y1 = conv3x3_bn_act(x_cbp, w1m, s1, t1, B=B, H=H, W=W, relu=True)
        if self.stride != 1:
            # TODO(synk): stride>1 conv is computed at stride 1 and subsampled
            # (computing only strided outputs inside the kernel would save FLOPs).
            y1 = y1.reshape(self.planes, B, H, W)[:, :, ::self.stride, ::self.stride]
            Ho, Wo = y1.shape[2], y1.shape[3]
            y1 = y1.reshape(self.planes, B * Ho * Wo)
        else:
            Ho, Wo = H, W

        if self.option == "A":
            sc = x_nchw[:, :, ::self.stride, ::self.stride]
            pad_c = self.planes // 4
            sc = jnp.pad(sc, ((0, 0), (pad_c, pad_c), (0, 0), (0, 0)))
            sc_cbp = _nchw_to_cbp(sc)
        else:
            # TODO(synk): option 'B' (1x1 conv + BN shortcut) not implemented.
            raise NotImplementedError("BasicBlock option 'B' shortcut not implemented")

        out = conv3x3_bn_act(y1, w2m, s2, t2, B=B, H=Ho, W=Wo,
                             residual=sc_cbp, relu=True)
        return _cbp_to_nchw(out, B, Ho, Wo)


# ---------------------------------------------------------------------------
# Self-test
# ---------------------------------------------------------------------------
if __name__ == "__main__":
    key = jax.random.PRNGKey(0)
    kx, kb1, kb2 = jax.random.split(key, 3)

    def ref_conv(xn, w, stride):
        return lax.conv_general_dilated(
            xn, w, window_strides=(stride, stride), padding=((1, 1), (1, 1)),
            dimension_numbers=("NCHW", "OIHW", "NCHW"),
            precision=lax.Precision.HIGHEST)

    def ref_block(x, blk):
        s1, t1 = BasicBlock._fold_bn(blk.bn1_gamma, blk.bn1_beta, blk.bn1_mean, blk.bn1_var)
        s2, t2 = BasicBlock._fold_bn(blk.bn2_gamma, blk.bn2_beta, blk.bn2_mean, blk.bn2_var)
        bc = lambda v: v.reshape(1, -1, 1, 1)
        out = jnp.maximum(ref_conv(x, blk.w1, blk.stride) * bc(s1) + bc(t1), 0.0)
        out = ref_conv(out, blk.w2, 1) * bc(s2) + bc(t2)
        if blk.stride != 1 or blk.in_planes != blk.planes:
            sc = x[:, :, ::blk.stride, ::blk.stride]
            pc = blk.planes // 4
            sc = jnp.pad(sc, ((0, 0), (pc, pc), (0, 0), (0, 0)))
        else:
            sc = x
        return jnp.maximum(out + sc, 0.0)

    def check(out, ref):
        err = jnp.max(jnp.abs(out - ref))
        rel = err / (jnp.max(jnp.abs(ref)) + 1e-6)
        assert rel < 2e-2, f"relative error too large: {rel} (abs {err})"

    # 1) Identity-shortcut block -> one fully fused pallas_call.
    B, C, H, W = 2, 16, 16, 16
    x = jax.random.normal(kx, (B, C, H, W), dtype=jnp.float32)
    blk1 = BasicBlock(C, C, stride=1, option="A", key=kb1)
    out1 = jax.block_until_ready(blk1(x))
    assert out1.shape == (B, C, H, W)
    check(out1, ref_block(x, blk1))

    # 2) Downsampling option-A block (stride 2, channel expansion).
    blk2 = BasicBlock(C, 2 * C, stride=2, option="A", key=kb2)
    out2 = jax.block_until_ready(blk2(x))
    assert out2.shape == (B, 2 * C, H // 2, W // 2)
    check(out2, ref_block(x, blk2))

    print("KERNEL_OK")
</pallas_src>

<mosaic_0001>
module attributes {stable_mosaic.version = 11 : i64} {
  func.func @kernel(%arg0: i32, %arg1: memref<16x256xf32, #tpu.memory_space<vmem>>, %arg2: memref<1x256xi32, #tpu.memory_space<vmem>>, %arg3: memref<1x256xi32, #tpu.memory_space<vmem>>, %arg4: memref<16x144xf32, #tpu.memory_space<vmem>>, %arg5: memref<16x1xf32, #tpu.memory_space<vmem>>, %arg6: memref<16x1xf32, #tpu.memory_space<vmem>>, %arg7: memref<16x144xf32, #tpu.memory_space<vmem>>, %arg8: memref<16x1xf32, #tpu.memory_space<vmem>>, %arg9: memref<16x1xf32, #tpu.memory_space<vmem>>, %arg10: memref<16x256xf32, #tpu.memory_space<vmem>>) attributes {dimension_semantics = [#tpu.dimension_semantics<parallel>], iteration_bounds = array<i64: 2>, scalar_prefetch = 0 : i64, scratch_operands = 0 : i64, tpu.core_type = #tpu.core_type<tc>, window_params = [{transform_indices = @transform_0, window_bounds = array<i64: 16, 256>}, {transform_indices = @transform_1, window_bounds = array<i64: 1, 256>}, {transform_indices = @transform_2, window_bounds = array<i64: 1, 256>}, {pipeline_mode = #tpu.pipeline_mode<synchronous>, transform_indices = @transform_3, window_bounds = array<i64: 16, 144>}, {pipeline_mode = #tpu.pipeline_mode<synchronous>, transform_indices = @transform_4, window_bounds = array<i64: 16, 1>}, {pipeline_mode = #tpu.pipeline_mode<synchronous>, transform_indices = @transform_5, window_bounds = array<i64: 16, 1>}, {pipeline_mode = #tpu.pipeline_mode<synchronous>, transform_indices = @transform_6, window_bounds = array<i64: 16, 144>}, {pipeline_mode = #tpu.pipeline_mode<synchronous>, transform_indices = @transform_7, window_bounds = array<i64: 16, 1>}, {pipeline_mode = #tpu.pipeline_mode<synchronous>, transform_indices = @transform_8, window_bounds = array<i64: 16, 1>}, {transform_indices = @transform_9, window_bounds = array<i64: 16, 256>}]} {
    %c0 = arith.constant 0 : index
    %c0_0 = arith.constant 0 : index
    %0 = vector.load %arg1[%c0, %c0_0] : memref<16x256xf32, #tpu.memory_space<vmem>>, vector<16x256xf32>
    %c0_1 = arith.constant 0 : index
    %c0_2 = arith.constant 0 : index
    %1 = vector.load %arg2[%c0_1, %c0_2] : memref<1x256xi32, #tpu.memory_space<vmem>>, vector<1x256xi32>
    %c0_3 = arith.constant 0 : index
    %c0_4 = arith.constant 0 : index
    %2 = vector.load %arg3[%c0_3, %c0_4] : memref<1x256xi32, #tpu.memory_space<vmem>>, vector<1x256xi32>
    %3 = vector.extract_strided_slice %0 {offsets = [0, 239], sizes = [16, 17], strides = [1, 1]} : vector<16x256xf32> to vector<16x17xf32>
    %4 = vector.extract_strided_slice %0 {offsets = [0, 0], sizes = [16, 239], strides = [1, 1]} : vector<16x256xf32> to vector<16x239xf32>
    %5 = tpu.concatenate %3, %4 in 1 : vector<16x17xf32>, vector<16x239xf32> -> vector<16x256xf32>
    %c-1_i32 = arith.constant -1 : i32
    %6 = vector.broadcast %c-1_i32 : i32 to vector<1x256xi32>
    %7 = arith.addi %1, %6 : vector<1x256xi32>
    %c-1_i32_5 = arith.constant -1 : i32
    %8 = vector.broadcast %c-1_i32_5 : i32 to vector<1x256xi32>
    %9 = arith.addi %2, %8 : vector<1x256xi32>
    %c0_i32 = arith.constant 0 : i32
    %10 = vector.broadcast %c0_i32 : i32 to vector<1x256xi32>
    %11 = arith.cmpi sge, %7, %10 : vector<1x256xi32>
    %c16_i32 = arith.constant 16 : i32
    %12 = vector.broadcast %c16_i32 : i32 to vector<1x256xi32>
    %13 = arith.cmpi slt, %7, %12 : vector<1x256xi32>
    %14 = arith.andi %11, %13 : vector<1x256xi1>
    %c0_i32_6 = arith.constant 0 : i32
    %15 = vector.broadcast %c0_i32_6 : i32 to vector<1x256xi32>
    %16 = arith.cmpi sge, %9, %15 : vector<1x256xi32>
    %17 = arith.andi %14, %16 : vector<1x256xi1>
    %c16_i32_7 = arith.constant 16 : i32
    %18 = vector.broadcast %c16_i32_7 : i32 to vector<1x256xi32>
    %19 = arith.cmpi slt, %9, %18 : vector<1x256xi32>
    %20 = arith.andi %17, %19 : vector<1x256xi1>
    %cst = arith.constant 0.000000e+00 : f32
    %21 = vector.broadcast %cst : f32 to vector<16x256xf32>
    %22 = vector.shape_cast %20 : vector<1x256xi1> to vector<1x256xi1>
    %23 = vector.broadcast %22 : vector<1x256xi1> to vector<16x256xi1>
    %24 = arith.select %23, %5, %21 : vector<16x256xi1>, vector<16x256xf32>
    %25 = vector.extract_strided_slice %0 {offsets = [0, 240], sizes = [16, 16], strides = [1, 1]} : vector<16x256xf32> to vector<16x16xf32>
    %26 = vector.extract_strided_slice %0 {offsets = [0, 0], sizes = [16, 240], strides = [1, 1]} : vector<16x256xf32> to vector<16x240xf32>
    %27 = tpu.concatenate %25, %26 in 1 : vector<16x16xf32>, vector<16x240xf32> -> vector<16x256xf32>
    %c-1_i32_8 = arith.constant -1 : i32
    %28 = vector.broadcast %c-1_i32_8 : i32 to vector<1x256xi32>
    %29 = arith.addi %1, %28 : vector<1x256xi32>
    %c0_i32_9 = arith.constant 0 : i32
    %30 = vector.broadcast %c0_i32_9 : i32 to vector<1x256xi32>
    %31 = arith.addi %2, %30 : vector<1x256xi32>
    %c0_i32_10 = arith.constant 0 : i32
    %32 = vector.broadcast %c0_i32_10 : i32 to vector<1x256xi32>
    %33 = arith.cmpi sge, %29, %32 : vector<1x256xi32>
    %c16_i32_11 = arith.constant 16 : i32
    %34 = vector.broadcast %c16_i32_11 : i32 to vector<1x256xi32>
    %35 = arith.cmpi slt, %29, %34 : vector<1x256xi32>
    %36 = arith.andi %33, %35 : vector<1x256xi1>
    %c0_i32_12 = arith.constant 0 : i32
    %37 = vector.broadcast %c0_i32_12 : i32 to vector<1x256xi32>
    %38 = arith.cmpi sge, %31, %37 : vector<1x256xi32>
    %39 = arith.andi %36, %38 : vector<1x256xi1>
    %c16_i32_13 = arith.constant 16 : i32
    %40 = vector.broadcast %c16_i32_13 : i32 to vector<1x256xi32>
    %41 = arith.cmpi slt, %31, %40 : vector<1x256xi32>
    %42 = arith.andi %39, %41 : vector<1x256xi1>
    %cst_14 = arith.constant 0.000000e+00 : f32
    %43 = vector.broadcast %cst_14 : f32 to vector<16x256xf32>
    %44 = vector.shape_cast %42 : vector<1x256xi1> to vector<1x256xi1>
    %45 = vector.broadcast %44 : vector<1x256xi1> to vector<16x256xi1>
    %46 = arith.select %45, %27, %43 : vector<16x256xi1>, vector<16x256xf32>
    %47 = vector.extract_strided_slice %0 {offsets = [0, 241], sizes = [16, 15], strides = [1, 1]} : vector<16x256xf32> to vector<16x15xf32>
    %48 = vector.extract_strided_slice %0 {offsets = [0, 0], sizes = [16, 241], strides = [1, 1]} : vector<16x256xf32> to vector<16x241xf32>
    %49 = tpu.concatenate %47, %48 in 1 : vector<16x15xf32>, vector<16x241xf32> -> vector<16x256xf32>
    %c-1_i32_15 = arith.constant -1 : i32
    %50 = vector.broadcast %c-1_i32_15 : i32 to vector<1x256xi32>
    %51 = arith.addi %1, %50 : vector<1x256xi32>
    %c1_i32 = arith.constant 1 : i32
    %52 = vector.broadcast %c1_i32 : i32 to vector<1x256xi32>
    %53 = arith.addi %2, %52 : vector<1x256xi32>
    %c0_i32_16 = arith.constant 0 : i32
    %54 = vector.broadcast %c0_i32_16 : i32 to vector<1x256xi32>
    %55 = arith.cmpi sge, %51, %54 : vector<1x256xi32>
    %c16_i32_17 = arith.constant 16 : i32
    %56 = vector.broadcast %c16_i32_17 : i32 to vector<1x256xi32>
    %57 = arith.cmpi slt, %51, %56 : vector<1x256xi32>
    %58 = arith.andi %55, %57 : vector<1x256xi1>
    %c0_i32_18 = arith.constant 0 : i32
    %59 = vector.broadcast %c0_i32_18 : i32 to vector<1x256xi32>
    %60 = arith.cmpi sge, %53, %59 : vector<1x256xi32>
    %61 = arith.andi %58, %60 : vector<1x256xi1>
    %c16_i32_19 = arith.constant 16 : i32
    %62 = vector.broadcast %c16_i32_19 : i32 to vector<1x256xi32>
    %63 = arith.cmpi slt, %53, %62 : vector<1x256xi32>
    %64 = arith.andi %61, %63 : vector<1x256xi1>
    %cst_20 = arith.constant 0.000000e+00 : f32
    %65 = vector.broadcast %cst_20 : f32 to vector<16x256xf32>
    %66 = vector.shape_cast %64 : vector<1x256xi1> to vector<1x256xi1>
    %67 = vector.broadcast %66 : vector<1x256xi1> to vector<16x256xi1>
    %68 = arith.select %67, %49, %65 : vector<16x256xi1>, vector<16x256xf32>
    %69 = vector.extract_strided_slice %0 {offsets = [0, 255], sizes = [16, 1], strides = [1, 1]} : vector<16x256xf32> to vector<16x1xf32>
    %70 = vector.extract_strided_slice %0 {offsets = [0, 0], sizes = [16, 255], strides = [1, 1]} : vector<16x256xf32> to vector<16x255xf32>
    %71 = tpu.concatenate %69, %70 in 1 : vector<16x1xf32>, vector<16x255xf32> -> vector<16x256xf32>
    %c0_i32_21 = arith.constant 0 : i32
    %72 = vector.broadcast %c0_i32_21 : i32 to vector<1x256xi32>
    %73 = arith.addi %1, %72 : vector<1x256xi32>
    %c-1_i32_22 = arith.constant -1 : i32
    %74 = vector.broadcast %c-1_i32_22 : i32 to vector<1x256xi32>
    %75 = arith.addi %2, %74 : vector<1x256xi32>
    %c0_i32_23 = arith.constant 0 : i32
    %76 = vector.broadcast %c0_i32_23 : i32 to vector<1x256xi32>
    %77 = arith.cmpi sge, %73, %76 : vector<1x256xi32>
    %c16_i32_24 = arith.constant 16 : i32
    %78 = vector.broadcast %c16_i32_24 : i32 to vector<1x256xi32>
    %79 = arith.cmpi slt, %73, %78 : vector<1x256xi32>
    %80 = arith.andi %77, %79 : vector<1x256xi1>
    %c0_i32_25 = arith.constant 0 : i32
    %81 = vector.broadcast %c0_i32_25 : i32 to vector<1x256xi32>
    %82 = arith.cmpi sge, %75, %81 : vector<1x256xi32>
    %83 = arith.andi %80, %82 : vector<1x256xi1>
    %c16_i32_26 = arith.constant 16 : i32
    %84 = vector.broadcast %c16_i32_26 : i32 to vector<1x256xi32>
    %85 = arith.cmpi slt, %75, %84 : vector<1x256xi32>
    %86 = arith.andi %83, %85 : vector<1x256xi1>
    %cst_27 = arith.constant 0.000000e+00 : f32
    %87 = vector.broadcast %cst_27 : f32 to vector<16x256xf32>
    %88 = vector.shape_cast %86 : vector<1x256xi1> to vector<1x256xi1>
    %89 = vector.broadcast %88 : vector<1x256xi1> to vector<16x256xi1>
    %90 = arith.select %89, %71, %87 : vector<16x256xi1>, vector<16x256xf32>
    %91 = vector.extract_strided_slice %0 {offsets = [0, 1], sizes = [16, 255], strides = [1, 1]} : vector<16x256xf32> to vector<16x255xf32>
    %92 = vector.extract_strided_slice %0 {offsets = [0, 0], sizes = [16, 1], strides = [1, 1]} : vector<16x256xf32> to vector<16x1xf32>
    %93 = tpu.concatenate %91, %92 in 1 : vector<16x255xf32>, vector<16x1xf32> -> vector<16x256xf32>
    %c0_i32_28 = arith.constant 0 : i32
    %94 = vector.broadcast %c0_i32_28 : i32 to vector<1x256xi32>
    %95 = arith.addi %1, %94 : vector<1x256xi32>
    %c1_i32_29 = arith.constant 1 : i32
    %96 = vector.broadcast %c1_i32_29 : i32 to vector<1x256xi32>
    %97 = arith.addi %2, %96 : vector<1x256xi32>
    %c0_i32_30 = arith.constant 0 : i32
    %98 = vector.broadcast %c0_i32_30 : i32 to vector<1x256xi32>
    %99 = arith.cmpi sge, %95, %98 : vector<1x256xi32>
    %c16_i32_31 = arith.constant 16 : i32
    %100 = vector.broadcast %c16_i32_31 : i32 to vector<1x256xi32>
    %101 = arith.cmpi slt, %95, %100 : vector<1x256xi32>
    %102 = arith.andi %99, %101 : vector<1x256xi1>
    %c0_i32_32 = arith.constant 0 : i32
    %103 = vector.broadcast %c0_i32_32 : i32 to vector<1x256xi32>
    %104 = arith.cmpi sge, %97, %103 : vector<1x256xi32>
    %105 = arith.andi %102, %104 : vector<1x256xi1>
    %c16_i32_33 = arith.constant 16 : i32
    %106 = vector.broadcast %c16_i32_33 : i32 to vector<1x256xi32>
    %107 = arith.cmpi slt, %97, %106 : vector<1x256xi32>
    %108 = arith.andi %105, %107 : vector<1x256xi1>
    %cst_34 = arith.constant 0.000000e+00 : f32
    %109 = vector.broadcast %cst_34 : f32 to vector<16x256xf32>
    %110 = vector.shape_cast %108 : vector<1x256xi1> to vector<1x256xi1>
    %111 = vector.broadcast %110 : vector<1x256xi1> to vector<16x256xi1>
    %112 = arith.select %111, %93, %109 : vector<16x256xi1>, vector<16x256xf32>
    %113 = vector.extract_strided_slice %0 {offsets = [0, 15], sizes = [16, 241], strides = [1, 1]} : vector<16x256xf32> to vector<16x241xf32>
    %114 = vector.extract_strided_slice %0 {offsets = [0, 0], sizes = [16, 15], strides = [1, 1]} : vector<16x256xf32> to vector<16x15xf32>
    %115 = tpu.concatenate %113, %114 in 1 : vector<16x241xf32>, vector<16x15xf32> -> vector<16x256xf32>
    %c1_i32_35 = arith.constant 1 : i32
    %116 = vector.broadcast %c1_i32_35 : i32 to vector<1x256xi32>
    %117 = arith.addi %1, %116 : vector<1x256xi32>
    %c-1_i32_36 = arith.constant -1 : i32
    %118 = vector.broadcast %c-1_i32_36 : i32 to vector<1x256xi32>
    %119 = arith.addi %2, %118 : vector<1x256xi32>
    %c0_i32_37 = arith.constant 0 : i32
    %120 = vector.broadcast %c0_i32_37 : i32 to vector<1x256xi32>
    %121 = arith.cmpi sge, %117, %120 : vector<1x256xi32>
    %c16_i32_38 = arith.constant 16 : i32
    %122 = vector.broadcast %c16_i32_38 : i32 to vector<1x256xi32>
    %123 = arith.cmpi slt, %117, %122 : vector<1x256xi32>
    %124 = arith.andi %121, %123 : vector<1x256xi1>
    %c0_i32_39 = arith.constant 0 : i32
    %125 = vector.broadcast %c0_i32_39 : i32 to vector<1x256xi32>
    %126 = arith.cmpi sge, %119, %125 : vector<1x256xi32>
    %127 = arith.andi %124, %126 : vector<1x256xi1>
    %c16_i32_40 = arith.constant 16 : i32
    %128 = vector.broadcast %c16_i32_40 : i32 to vector<1x256xi32>
    %129 = arith.cmpi slt, %119, %128 : vector<1x256xi32>
    %130 = arith.andi %127, %129 : vector<1x256xi1>
    %cst_41 = arith.constant 0.000000e+00 : f32
    %131 = vector.broadcast %cst_41 : f32 to vector<16x256xf32>
    %132 = vector.shape_cast %130 : vector<1x256xi1> to vector<1x256xi1>
    %133 = vector.broadcast %132 : vector<1x256xi1> to vector<16x256xi1>
    %134 = arith.select %133, %115, %131 : vector<16x256xi1>, vector<16x256xf32>
    %135 = vector.extract_strided_slice %0 {offsets = [0, 16], sizes = [16, 240], strides = [1, 1]} : vector<16x256xf32> to vector<16x240xf32>
    %136 = vector.extract_strided_slice %0 {offsets = [0, 0], sizes = [16, 16], strides = [1, 1]} : vector<16x256xf32> to vector<16x16xf32>
    %137 = tpu.concatenate %135, %136 in 1 : vector<16x240xf32>, vector<16x16xf32> -> vector<16x256xf32>
    %c1_i32_42 = arith.constant 1 : i32
    %138 = vector.broadcast %c1_i32_42 : i32 to vector<1x256xi32>
    %139 = arith.addi %1, %138 : vector<1x256xi32>
    %c0_i32_43 = arith.constant 0 : i32
    %140 = vector.broadcast %c0_i32_43 : i32 to vector<1x256xi32>
    %141 = arith.addi %2, %140 : vector<1x256xi32>
    %c0_i32_44 = arith.constant 0 : i32
    %142 = vector.broadcast %c0_i32_44 : i32 to vector<1x256xi32>
    %143 = arith.cmpi sge, %139, %142 : vector<1x256xi32>
    %c16_i32_45 = arith.constant 16 : i32
    %144 = vector.broadcast %c16_i32_45 : i32 to vector<1x256xi32>
    %145 = arith.cmpi slt, %139, %144 : vector<1x256xi32>
    %146 = arith.andi %143, %145 : vector<1x256xi1>
    %c0_i32_46 = arith.constant 0 : i32
    %147 = vector.broadcast %c0_i32_46 : i32 to vector<1x256xi32>
    %148 = arith.cmpi sge, %141, %147 : vector<1x256xi32>
    %149 = arith.andi %146, %148 : vector<1x256xi1>
    %c16_i32_47 = arith.constant 16 : i32
    %150 = vector.broadcast %c16_i32_47 : i32 to vector<1x256xi32>
    %151 = arith.cmpi slt, %141, %150 : vector<1x256xi32>
    %152 = arith.andi %149, %151 : vector<1x256xi1>
    %cst_48 = arith.constant 0.000000e+00 : f32
    %153 = vector.broadcast %cst_48 : f32 to vector<16x256xf32>
    %154 = vector.shape_cast %152 : vector<1x256xi1> to vector<1x256xi1>
    %155 = vector.broadcast %154 : vector<1x256xi1> to vector<16x256xi1>
    %156 = arith.select %155, %137, %153 : vector<16x256xi1>, vector<16x256xf32>
    %157 = vector.extract_strided_slice %0 {offsets = [0, 17], sizes = [16, 239], strides = [1, 1]} : vector<16x256xf32> to vector<16x239xf32>
    %158 = vector.extract_strided_slice %0 {offsets = [0, 0], sizes = [16, 17], strides = [1, 1]} : vector<16x256xf32> to vector<16x17xf32>
    %159 = tpu.concatenate %157, %158 in 1 : vector<16x239xf32>, vector<16x17xf32> -> vector<16x256xf32>
    %c1_i32_49 = arith.constant 1 : i32
    %160 = vector.broadcast %c1_i32_49 : i32 to vector<1x256xi32>
    %161 = arith.addi %1, %160 : vector<1x256xi32>
    %c1_i32_50 = arith.constant 1 : i32
    %162 = vector.broadcast %c1_i32_50 : i32 to vector<1x256xi32>
    %163 = arith.addi %2, %162 : vector<1x256xi32>
    %c0_i32_51 = arith.constant 0 : i32
    %164 = vector.broadcast %c0_i32_51 : i32 to vector<1x256xi32>
    %165 = arith.cmpi sge, %161, %164 : vector<1x256xi32>
    %c16_i32_52 = arith.constant 16 : i32
    %166 = vector.broadcast %c16_i32_52 : i32 to vector<1x256xi32>
    %167 = arith.cmpi slt, %161, %166 : vector<1x256xi32>
    %168 = arith.andi %165, %167 : vector<1x256xi1>
    %c0_i32_53 = arith.constant 0 : i32
    %169 = vector.broadcast %c0_i32_53 : i32 to vector<1x256xi32>
    %170 = arith.cmpi sge, %163, %169 : vector<1x256xi32>
    %171 = arith.andi %168, %170 : vector<1x256xi1>
    %c16_i32_54 = arith.constant 16 : i32
    %172 = vector.broadcast %c16_i32_54 : i32 to vector<1x256xi32>
    %173 = arith.cmpi slt, %163, %172 : vector<1x256xi32>
    %174 = arith.andi %171, %173 : vector<1x256xi1>
    %cst_55 = arith.constant 0.000000e+00 : f32
    %175 = vector.broadcast %cst_55 : f32 to vector<16x256xf32>
    %176 = vector.shape_cast %174 : vector<1x256xi1> to vector<1x256xi1>
    %177 = vector.broadcast %176 : vector<1x256xi1> to vector<16x256xi1>
    %178 = arith.select %177, %159, %175 : vector<16x256xi1>, vector<16x256xf32>
    %179 = tpu.concatenate %24, %46, %68, %90, %0, %112, %134, %156, %178 in 0 : vector<16x256xf32>, vector<16x256xf32>, vector<16x256xf32>, vector<16x256xf32>, vector<16x256xf32>, vector<16x256xf32>, vector<16x256xf32>, vector<16x256xf32>, vector<16x256xf32> -> vector<144x256xf32>
    %c0_56 = arith.constant 0 : index
    %c0_57 = arith.constant 0 : index
    %180 = vector.load %arg4[%c0_56, %c0_57] : memref<16x144xf32, #tpu.memory_space<vmem>>, vector<16x144xf32>
    %cst_58 = arith.constant dense<0.000000e+00> : vector<16x256xf32>
    %181 = tpu.matmul %180, %179, %cst_58 {dimension_numbers = #tpu.dot_dimension_numbers<[1], [0], [0], [1], [0, 0, 1, 1], [], []>} : vector<16x144xf32>, vector<144x256xf32>, vector<16x256xf32> -> vector<16x256xf32>
    %c0_59 = arith.constant 0 : index
    %c0_60 = arith.constant 0 : index
    %182 = vector.load %arg5[%c0_59, %c0_60] : memref<16x1xf32, #tpu.memory_space<vmem>>, vector<16x1xf32>
    %183 = vector.broadcast %182 : vector<16x1xf32> to vector<16x256xf32>
    %184 = arith.mulf %181, %183 : vector<16x256xf32>
    %c0_61 = arith.constant 0 : index
    %c0_62 = arith.constant 0 : index
    %185 = vector.load %arg6[%c0_61, %c0_62] : memref<16x1xf32, #tpu.memory_space<vmem>>, vector<16x1xf32>
    %186 = vector.broadcast %185 : vector<16x1xf32> to vector<16x256xf32>
    %187 = arith.addf %184, %186 : vector<16x256xf32>
    %cst_63 = arith.constant 0.000000e+00 : f32
    %188 = vector.broadcast %cst_63 : f32 to vector<16x256xf32>
    %189 = arith.maximumf %187, %188 : vector<16x256xf32>
    %190 = vector.extract_strided_slice %189 {offsets = [0, 239], sizes = [16, 17], strides = [1, 1]} : vector<16x256xf32> to vector<16x17xf32>
    %191 = vector.extract_strided_slice %189 {offsets = [0, 0], sizes = [16, 239], strides = [1, 1]} : vector<16x256xf32> to vector<16x239xf32>
    %192 = tpu.concatenate %190, %191 in 1 : vector<16x17xf32>, vector<16x239xf32> -> vector<16x256xf32>
    %c-1_i32_64 = arith.constant -1 : i32
    %193 = vector.broadcast %c-1_i32_64 : i32 to vector<1x256xi32>
    %194 = arith.addi %1, %193 : vector<1x256xi32>
    %c-1_i32_65 = arith.constant -1 : i32
    %195 = vector.broadcast %c-1_i32_65 : i32 to vector<1x256xi32>
    %196 = arith.addi %2, %195 : vector<1x256xi32>
    %c0_i32_66 = arith.constant 0 : i32
    %197 = vector.broadcast %c0_i32_66 : i32 to vector<1x256xi32>
    %198 = arith.cmpi sge, %194, %197 : vector<1x256xi32>
    %c16_i32_67 = arith.constant 16 : i32
    %199 = vector.broadcast %c16_i32_67 : i32 to vector<1x256xi32>
    %200 = arith.cmpi slt, %194, %199 : vector<1x256xi32>
    %201 = arith.andi %198, %200 : vector<1x256xi1>
    %c0_i32_68 = arith.constant 0 : i32
    %202 = vector.broadcast %c0_i32_68 : i32 to vector<1x256xi32>
    %203 = arith.cmpi sge, %196, %202 : vector<1x256xi32>
    %204 = arith.andi %201, %203 : vector<1x256xi1>
    %c16_i32_69 = arith.constant 16 : i32
    %205 = vector.broadcast %c16_i32_69 : i32 to vector<1x256xi32>
    %206 = arith.cmpi slt, %196, %205 : vector<1x256xi32>
    %207 = arith.andi %204, %206 : vector<1x256xi1>
    %cst_70 = arith.constant 0.000000e+00 : f32
    %208 = vector.broadcast %cst_70 : f32 to vector<16x256xf32>
    %209 = vector.shape_cast %207 : vector<1x256xi1> to vector<1x256xi1>
    %210 = vector.broadcast %209 : vector<1x256xi1> to vector<16x256xi1>
    %211 = arith.select %210, %192, %208 : vector<16x256xi1>, vector<16x256xf32>
    %212 = vector.extract_strided_slice %189 {offsets = [0, 240], sizes = [16, 16], strides = [1, 1]} : vector<16x256xf32> to vector<16x16xf32>
    %213 = vector.extract_strided_slice %189 {offsets = [0, 0], sizes = [16, 240], strides = [1, 1]} : vector<16x256xf32> to vector<16x240xf32>
    %214 = tpu.concatenate %212, %213 in 1 : vector<16x16xf32>, vector<16x240xf32> -> vector<16x256xf32>
    %c-1_i32_71 = arith.constant -1 : i32
    %215 = vector.broadcast %c-1_i32_71 : i32 to vector<1x256xi32>
    %216 = arith.addi %1, %215 : vector<1x256xi32>
    %c0_i32_72 = arith.constant 0 : i32
    %217 = vector.broadcast %c0_i32_72 : i32 to vector<1x256xi32>
    %218 = arith.addi %2, %217 : vector<1x256xi32>
    %c0_i32_73 = arith.constant 0 : i32
    %219 = vector.broadcast %c0_i32_73 : i32 to vector<1x256xi32>
    %220 = arith.cmpi sge, %216, %219 : vector<1x256xi32>
    %c16_i32_74 = arith.constant 16 : i32
    %221 = vector.broadcast %c16_i32_74 : i32 to vector<1x256xi32>
    %222 = arith.cmpi slt, %216, %221 : vector<1x256xi32>
    %223 = arith.andi %220, %222 : vector<1x256xi1>
    %c0_i32_75 = arith.constant 0 : i32
    %224 = vector.broadcast %c0_i32_75 : i32 to vector<1x256xi32>
    %225 = arith.cmpi sge, %218, %224 : vector<1x256xi32>
    %226 = arith.andi %223, %225 : vector<1x256xi1>
    %c16_i32_76 = arith.constant 16 : i32
    %227 = vector.broadcast %c16_i32_76 : i32 to vector<1x256xi32>
    %228 = arith.cmpi slt, %218, %227 : vector<1x256xi32>
    %229 = arith.andi %226, %228 : vector<1x256xi1>
    %cst_77 = arith.constant 0.000000e+00 : f32
    %230 = vector.broadcast %cst_77 : f32 to vector<16x256xf32>
    %231 = vector.shape_cast %229 : vector<1x256xi1> to vector<1x256xi1>
    %232 = vector.broadcast %231 : vector<1x256xi1> to vector<16x256xi1>
    %233 = arith.select %232, %214, %230 : vector<16x256xi1>, vector<16x256xf32>
    %234 = vector.extract_strided_slice %189 {offsets = [0, 241], sizes = [16, 15], strides = [1, 1]} : vector<16x256xf32> to vector<16x15xf32>
    %235 = vector.extract_strided_slice %189 {offsets = [0, 0], sizes = [16, 241], strides = [1, 1]} : vector<16x256xf32> to vector<16x241xf32>
    %236 = tpu.concatenate %234, %235 in 1 : vector<16x15xf32>, vector<16x241xf32> -> vector<16x256xf32>
    %c-1_i32_78 = arith.constant -1 : i32
    %237 = vector.broadcast %c-1_i32_78 : i32 to vector<1x256xi32>
    %238 = arith.addi %1, %237 : vector<1x256xi32>
    %c1_i32_79 = arith.constant 1 : i32
    %239 = vector.broadcast %c1_i32_79 : i32 to vector<1x256xi32>
    %240 = arith.addi %2, %239 : vector<1x256xi32>
    %c0_i32_80 = arith.constant 0 : i32
    %241 = vector.broadcast %c0_i32_80 : i32 to vector<1x256xi32>
    %242 = arith.cmpi sge, %238, %241 : vector<1x256xi32>
    %c16_i32_81 = arith.constant 16 : i32
    %243 = vector.broadcast %c16_i32_81 : i32 to vector<1x256xi32>
    %244 = arith.cmpi slt, %238, %243 : vector<1x256xi32>
    %245 = arith.andi %242, %244 : vector<1x256xi1>
    %c0_i32_82 = arith.constant 0 : i32
    %246 = vector.broadcast %c0_i32_82 : i32 to vector<1x256xi32>
    %247 = arith.cmpi sge, %240, %246 : vector<1x256xi32>
    %248 = arith.andi %245, %247 : vector<1x256xi1>
    %c16_i32_83 = arith.constant 16 : i32
    %249 = vector.broadcast %c16_i32_83 : i32 to vector<1x256xi32>
    %250 = arith.cmpi slt, %240, %249 : vector<1x256xi32>
    %251 = arith.andi %248, %250 : vector<1x256xi1>
    %cst_84 = arith.constant 0.000000e+00 : f32
    %252 = vector.broadcast %cst_84 : f32 to vector<16x256xf32>
    %253 = vector.shape_cast %251 : vector<1x256xi1> to vector<1x256xi1>
    %254 = vector.broadcast %253 : vector<1x256xi1> to vector<16x256xi1>
    %255 = arith.select %254, %236, %252 : vector<16x256xi1>, vector<16x256xf32>
    %256 = vector.extract_strided_slice %189 {offsets = [0, 255], sizes = [16, 1], strides = [1, 1]} : vector<16x256xf32> to vector<16x1xf32>
    %257 = vector.extract_strided_slice %189 {offsets = [0, 0], sizes = [16, 255], strides = [1, 1]} : vector<16x256xf32> to vector<16x255xf32>
    %258 = tpu.concatenate %256, %257 in 1 : vector<16x1xf32>, vector<16x255xf32> -> vector<16x256xf32>
    %c0_i32_85 = arith.constant 0 : i32
    %259 = vector.broadcast %c0_i32_85 : i32 to vector<1x256xi32>
    %260 = arith.addi %1, %259 : vector<1x256xi32>
    %c-1_i32_86 = arith.constant -1 : i32
    %261 = vector.broadcast %c-1_i32_86 : i32 to vector<1x256xi32>
    %262 = arith.addi %2, %261 : vector<1x256xi32>
    %c0_i32_87 = arith.constant 0 : i32
    %263 = vector.broadcast %c0_i32_87 : i32 to vector<1x256xi32>
    %264 = arith.cmpi sge, %260, %263 : vector<1x256xi32>
    %c16_i32_88 = arith.constant 16 : i32
    %265 = vector.broadcast %c16_i32_88 : i32 to vector<1x256xi32>
    %266 = arith.cmpi slt, %260, %265 : vector<1x256xi32>
    %267 = arith.andi %264, %266 : vector<1x256xi1>
    %c0_i32_89 = arith.constant 0 : i32
    %268 = vector.broadcast %c0_i32_89 : i32 to vector<1x256xi32>
    %269 = arith.cmpi sge, %262, %268 : vector<1x256xi32>
    %270 = arith.andi %267, %269 : vector<1x256xi1>
    %c16_i32_90 = arith.constant 16 : i32
    %271 = vector.broadcast %c16_i32_90 : i32 to vector<1x256xi32>
    %272 = arith.cmpi slt, %262, %271 : vector<1x256xi32>
    %273 = arith.andi %270, %272 : vector<1x256xi1>
    %cst_91 = arith.constant 0.000000e+00 : f32
    %274 = vector.broadcast %cst_91 : f32 to vector<16x256xf32>
    %275 = vector.shape_cast %273 : vector<1x256xi1> to vector<1x256xi1>
    %276 = vector.broadcast %275 : vector<1x256xi1> to vector<16x256xi1>
    %277 = arith.select %276, %258, %274 : vector<16x256xi1>, vector<16x256xf32>
    %278 = vector.extract_strided_slice %189 {offsets = [0, 1], sizes = [16, 255], strides = [1, 1]} : vector<16x256xf32> to vector<16x255xf32>
    %279 = vector.extract_strided_slice %189 {offsets = [0, 0], sizes = [16, 1], strides = [1, 1]} : vector<16x256xf32> to vector<16x1xf32>
    %280 = tpu.concatenate %278, %279 in 1 : vector<16x255xf32>, vector<16x1xf32> -> vector<16x256xf32>
    %c0_i32_92 = arith.constant 0 : i32
    %281 = vector.broadcast %c0_i32_92 : i32 to vector<1x256xi32>
    %282 = arith.addi %1, %281 : vector<1x256xi32>
    %c1_i32_93 = arith.constant 1 : i32
    %283 = vector.broadcast %c1_i32_93 : i32 to vector<1x256xi32>
    %284 = arith.addi %2, %283 : vector<1x256xi32>
    %c0_i32_94 = arith.constant 0 : i32
    %285 = vector.broadcast %c0_i32_94 : i32 to vector<1x256xi32>
    %286 = arith.cmpi sge, %282, %285 : vector<1x256xi32>
    %c16_i32_95 = arith.constant 16 : i32
    %287 = vector.broadcast %c16_i32_95 : i32 to vector<1x256xi32>
    %288 = arith.cmpi slt, %282, %287 : vector<1x256xi32>
    %289 = arith.andi %286, %288 : vector<1x256xi1>
    %c0_i32_96 = arith.constant 0 : i32
    %290 = vector.broadcast %c0_i32_96 : i32 to vector<1x256xi32>
    %291 = arith.cmpi sge, %284, %290 : vector<1x256xi32>
    %292 = arith.andi %289, %291 : vector<1x256xi1>
    %c16_i32_97 = arith.constant 16 : i32
    %293 = vector.broadcast %c16_i32_97 : i32 to vector<1x256xi32>
    %294 = arith.cmpi slt, %284, %293 : vector<1x256xi32>
    %295 = arith.andi %292, %294 : vector<1x256xi1>
    %cst_98 = arith.constant 0.000000e+00 : f32
    %296 = vector.broadcast %cst_98 : f32 to vector<16x256xf32>
    %297 = vector.shape_cast %295 : vector<1x256xi1> to vector<1x256xi1>
    %298 = vector.broadcast %297 : vector<1x256xi1> to vector<16x256xi1>
    %299 = arith.select %298, %280, %296 : vector<16x256xi1>, vector<16x256xf32>
    %300 = vector.extract_strided_slice %189 {offsets = [0, 15], sizes = [16, 241], strides = [1, 1]} : vector<16x256xf32> to vector<16x241xf32>
    %301 = vector.extract_strided_slice %189 {offsets = [0, 0], sizes = [16, 15], strides = [1, 1]} : vector<16x256xf32> to vector<16x15xf32>
    %302 = tpu.concatenate %300, %301 in 1 : vector<16x241xf32>, vector<16x15xf32> -> vector<16x256xf32>
    %c1_i32_99 = arith.constant 1 : i32
    %303 = vector.broadcast %c1_i32_99 : i32 to vector<1x256xi32>
    %304 = arith.addi %1, %303 : vector<1x256xi32>
    %c-1_i32_100 = arith.constant -1 : i32
    %305 = vector.broadcast %c-1_i32_100 : i32 to vector<1x256xi32>
    %306 = arith.addi %2, %305 : vector<1x256xi32>
    %c0_i32_101 = arith.constant 0 : i32
    %307 = vector.broadcast %c0_i32_101 : i32 to vector<1x256xi32>
    %308 = arith.cmpi sge, %304, %307 : vector<1x256xi32>
    %c16_i32_102 = arith.constant 16 : i32
    %309 = vector.broadcast %c16_i32_102 : i32 to vector<1x256xi32>
    %310 = arith.cmpi slt, %304, %309 : vector<1x256xi32>
    %311 = arith.andi %308, %310 : vector<1x256xi1>
    %c0_i32_103 = arith.constant 0 : i32
    %312 = vector.broadcast %c0_i32_103 : i32 to vector<1x256xi32>
    %313 = arith.cmpi sge, %306, %312 : vector<1x256xi32>
    %314 = arith.andi %311, %313 : vector<1x256xi1>
    %c16_i32_104 = arith.constant 16 : i32
    %315 = vector.broadcast %c16_i32_104 : i32 to vector<1x256xi32>
    %316 = arith.cmpi slt, %306, %315 : vector<1x256xi32>
    %317 = arith.andi %314, %316 : vector<1x256xi1>
    %cst_105 = arith.constant 0.000000e+00 : f32
    %318 = vector.broadcast %cst_105 : f32 to vector<16x256xf32>
    %319 = vector.shape_cast %317 : vector<1x256xi1> to vector<1x256xi1>
    %320 = vector.broadcast %319 : vector<1x256xi1> to vector<16x256xi1>
    %321 = arith.select %320, %302, %318 : vector<16x256xi1>, vector<16x256xf32>
    %322 = vector.extract_strided_slice %189 {offsets = [0, 16], sizes = [16, 240], strides = [1, 1]} : vector<16x256xf32> to vector<16x240xf32>
    %323 = vector.extract_strided_slice %189 {offsets = [0, 0], sizes = [16, 16], strides = [1, 1]} : vector<16x256xf32> to vector<16x16xf32>
    %324 = tpu.concatenate %322, %323 in 1 : vector<16x240xf32>, vector<16x16xf32> -> vector<16x256xf32>
    %c1_i32_106 = arith.constant 1 : i32
    %325 = vector.broadcast %c1_i32_106 : i32 to vector<1x256xi32>
    %326 = arith.addi %1, %325 : vector<1x256xi32>
    %c0_i32_107 = arith.constant 0 : i32
    %327 = vector.broadcast %c0_i32_107 : i32 to vector<1x256xi32>
    %328 = arith.addi %2, %327 : vector<1x256xi32>
    %c0_i32_108 = arith.constant 0 : i32
    %329 = vector.broadcast %c0_i32_108 : i32 to vector<1x256xi32>
    %330 = arith.cmpi sge, %326, %329 : vector<1x256xi32>
    %c16_i32_109 = arith.constant 16 : i32
    %331 = vector.broadcast %c16_i32_109 : i32 to vector<1x256xi32>
    %332 = arith.cmpi slt, %326, %331 : vector<1x256xi32>
    %333 = arith.andi %330, %332 : vector<1x256xi1>
    %c0_i32_110 = arith.constant 0 : i32
    %334 = vector.broadcast %c0_i32_110 : i32 to vector<1x256xi32>
    %335 = arith.cmpi sge, %328, %334 : vector<1x256xi32>
    %336 = arith.andi %333, %335 : vector<1x256xi1>
    %c16_i32_111 = arith.constant 16 : i32
    %337 = vector.broadcast %c16_i32_111 : i32 to vector<1x256xi32>
    %338 = arith.cmpi slt, %328, %337 : vector<1x256xi32>
    %339 = arith.andi %336, %338 : vector<1x256xi1>
    %cst_112 = arith.constant 0.000000e+00 : f32
    %340 = vector.broadcast %cst_112 : f32 to vector<16x256xf32>
    %341 = vector.shape_cast %339 : vector<1x256xi1> to vector<1x256xi1>
    %342 = vector.broadcast %341 : vector<1x256xi1> to vector<16x256xi1>
    %343 = arith.select %342, %324, %340 : vector<16x256xi1>, vector<16x256xf32>
    %344 = vector.extract_strided_slice %189 {offsets = [0, 17], sizes = [16, 239], strides = [1, 1]} : vector<16x256xf32> to vector<16x239xf32>
    %345 = vector.extract_strided_slice %189 {offsets = [0, 0], sizes = [16, 17], strides = [1, 1]} : vector<16x256xf32> to vector<16x17xf32>
    %346 = tpu.concatenate %344, %345 in 1 : vector<16x239xf32>, vector<16x17xf32> -> vector<16x256xf32>
    %c1_i32_113 = arith.constant 1 : i32
    %347 = vector.broadcast %c1_i32_113 : i32 to vector<1x256xi32>
    %348 = arith.addi %1, %347 : vector<1x256xi32>
    %c1_i32_114 = arith.constant 1 : i32
    %349 = vector.broadcast %c1_i32_114 : i32 to vector<1x256xi32>
    %350 = arith.addi %2, %349 : vector<1x256xi32>
    %c0_i32_115 = arith.constant 0 : i32
    %351 = vector.broadcast %c0_i32_115 : i32 to vector<1x256xi32>
    %352 = arith.cmpi sge, %348, %351 : vector<1x256xi32>
    %c16_i32_116 = arith.constant 16 : i32
    %353 = vector.broadcast %c16_i32_116 : i32 to vector<1x256xi32>
    %354 = arith.cmpi slt, %348, %353 : vector<1x256xi32>
    %355 = arith.andi %352, %354 : vector<1x256xi1>
    %c0_i32_117 = arith.constant 0 : i32
    %356 = vector.broadcast %c0_i32_117 : i32 to vector<1x256xi32>
    %357 = arith.cmpi sge, %350, %356 : vector<1x256xi32>
    %358 = arith.andi %355, %357 : vector<1x256xi1>
    %c16_i32_118 = arith.constant 16 : i32
    %359 = vector.broadcast %c16_i32_118 : i32 to vector<1x256xi32>
    %360 = arith.cmpi slt, %350, %359 : vector<1x256xi32>
    %361 = arith.andi %358, %360 : vector<1x256xi1>
    %cst_119 = arith.constant 0.000000e+00 : f32
    %362 = vector.broadcast %cst_119 : f32 to vector<16x256xf32>
    %363 = vector.shape_cast %361 : vector<1x256xi1> to vector<1x256xi1>
    %364 = vector.broadcast %363 : vector<1x256xi1> to vector<16x256xi1>
    %365 = arith.select %364, %346, %362 : vector<16x256xi1>, vector<16x256xf32>
    %366 = tpu.concatenate %211, %233, %255, %277, %189, %299, %321, %343, %365 in 0 : vector<16x256xf32>, vector<16x256xf32>, vector<16x256xf32>, vector<16x256xf32>, vector<16x256xf32>, vector<16x256xf32>, vector<16x256xf32>, vector<16x256xf32>, vector<16x256xf32> -> vector<144x256xf32>
    %c0_120 = arith.constant 0 : index
    %c0_121 = arith.constant 0 : index
    %367 = vector.load %arg7[%c0_120, %c0_121] : memref<16x144xf32, #tpu.memory_space<vmem>>, vector<16x144xf32>
    %cst_122 = arith.constant dense<0.000000e+00> : vector<16x256xf32>
    %368 = tpu.matmul %367, %366, %cst_122 {dimension_numbers = #tpu.dot_dimension_numbers<[1], [0], [0], [1], [0, 0, 1, 1], [], []>} : vector<16x144xf32>, vector<144x256xf32>, vector<16x256xf32> -> vector<16x256xf32>
    %c0_123 = arith.constant 0 : index
    %c0_124 = arith.constant 0 : index
    %369 = vector.load %arg8[%c0_123, %c0_124] : memref<16x1xf32, #tpu.memory_space<vmem>>, vector<16x1xf32>
    %370 = vector.broadcast %369 : vector<16x1xf32> to vector<16x256xf32>
    %371 = arith.mulf %368, %370 : vector<16x256xf32>
    %c0_125 = arith.constant 0 : index
    %c0_126 = arith.constant 0 : index
    %372 = vector.load %arg9[%c0_125, %c0_126] : memref<16x1xf32, #tpu.memory_space<vmem>>, vector<16x1xf32>
    %373 = vector.broadcast %372 : vector<16x1xf32> to vector<16x256xf32>
    %374 = arith.addf %371, %373 : vector<16x256xf32>
    %375 = arith.addf %374, %0 : vector<16x256xf32>
    %cst_127 = arith.constant 0.000000e+00 : f32
    %376 = vector.broadcast %cst_127 : f32 to vector<16x256xf32>
    %377 = arith.maximumf %375, %376 : vector<16x256xf32>
    %c0_128 = arith.constant 0 : index
    %c0_129 = arith.constant 0 : index
    %378 = vector.load %arg10[%c0_128, %c0_129] : memref<16x256xf32, #tpu.memory_space<vmem>>, vector<16x256xf32>
    tpu.vector_store %arg10[%c0_128, %c0_129], %377 {strides = array<i32>} : memref<16x256xf32, #tpu.memory_space<vmem>>, vector<16x256xf32>,
    return
  }
  func.func @transform_0(%arg0: i32) -> (i32, i32) {
    %c0_i32 = arith.constant 0 : i32
    %c0_i32_0 = arith.constant 0 : i32
    return %c0_i32, %arg0 : i32, i32
  }
  func.func @transform_1(%arg0: i32) -> (i32, i32) {
    %c0_i32 = arith.constant 0 : i32
    %c0_i32_0 = arith.constant 0 : i32
    return %c0_i32, %arg0 : i32, i32
  }
  func.func @transform_2(%arg0: i32) -> (i32, i32) {
    %c0_i32 = arith.constant 0 : i32
    %c0_i32_0 = arith.constant 0 : i32
    return %c0_i32, %arg0 : i32, i32
  }
  func.func @transform_3(%arg0: i32) -> (i32, i32) {
    %c0_i32 = arith.constant 0 : i32
    %c0_i32_0 = arith.constant 0 : i32
    %c0_i32_1 = arith.constant 0 : i32
    return %c0_i32, %c0_i32_0 : i32, i32
  }
  func.func @transform_4(%arg0: i32) -> (i32, i32) {
    %c0_i32 = arith.constant 0 : i32
    %c0_i32_0 = arith.constant 0 : i32
    %c0_i32_1 = arith.constant 0 : i32
    return %c0_i32, %c0_i32_0 : i32, i32
  }
  func.func @transform_5(%arg0: i32) -> (i32, i32) {
    %c0_i32 = arith.constant 0 : i32
    %c0_i32_0 = arith.constant 0 : i32
    %c0_i32_1 = arith.constant 0 : i32
    return %c0_i32, %c0_i32_0 : i32, i32
  }
  func.func @transform_6(%arg0: i32) -> (i32, i32) {
    %c0_i32 = arith.constant 0 : i32
    %c0_i32_0 = arith.constant 0 : i32
    %c0_i32_1 = arith.constant 0 : i32
    return %c0_i32, %c0_i32_0 : i32, i32
  }
  func.func @transform_7(%arg0: i32) -> (i32, i32) {
    %c0_i32 = arith.constant 0 : i32
    %c0_i32_0 = arith.constant 0 : i32
    %c0_i32_1 = arith.constant 0 : i32
    return %c0_i32, %c0_i32_0 : i32, i32
  }
  func.func @transform_8(%arg0: i32) -> (i32, i32) {
    %c0_i32 = arith.constant 0 : i32
    %c0_i32_0 = arith.constant 0 : i32
    %c0_i32_1 = arith.constant 0 : i32
    return %c0_i32, %c0_i32_0 : i32, i32
  }
  func.func @transform_9(%arg0: i32) -> (i32, i32) {
    %c0_i32 = arith.constant 0 : i32
    %c0_i32_0 = arith.constant 0 : i32
    return %c0_i32, %arg0 : i32, i32
  }
}

</mosaic_0001>

<llo_original>
// kernel: tpu_custom_call.1
$region0: #{tpu_custom_call.1}
  #allocation0 [shape = 'u32[]', space=smem, size = 0x4, offset = 0x4, fixed_abs, tag = 'smem constant byte address 0x4 - core index']
  #allocation1 [shape = 'u32[144,128]{1,0:T(1,128)}', space=vmem, size = 0x12000, scoped, tag = 'internal scratch']
  %s0 = inlined_call_operand.vmem [shape: f32[16,512], index: 0, kind: input, shape index: {}]
  %s1 = inlined_call_operand.vmem [shape: s32[1,512], index: 1, kind: input, shape index: {}]
  %s2 = inlined_call_operand.vmem [shape: s32[1,512], index: 2, kind: input, shape index: {}]
  %s3 = inlined_call_operand.hbm [shape: f32[16,144], index: 3, kind: input, shape index: {}]
  %s4 = inlined_call_operand.vmem [shape: f32[16,1], index: 4, kind: input, shape index: {}]
  %s5 = inlined_call_operand.vmem [shape: f32[16,1], index: 5, kind: input, shape index: {}]
  %s6 = inlined_call_operand.hbm [shape: f32[16,144], index: 6, kind: input, shape index: {}]
  %s7 = inlined_call_operand.vmem [shape: f32[16,1], index: 7, kind: input, shape index: {}]
  %s8 = inlined_call_operand.vmem [shape: f32[16,1], index: 8, kind: input, shape index: {}]
  %s9 = inlined_call_operand.hbm [shape: f32[16,512], index: 9, kind: output, shape index: {}]
  %s10 = sld [smem:[#allocation0]]
  $region100: #{tpu_custom_call.1} parent=0
    _
  %s12 = ssub.s32 1, %s10
  %s13 = scalar_select 0, %s12, %s10
  $region1: #{tpu_custom_call.1} parent=0
    #allocation2 [shape = 'u8[32768]{0}', space=vmem, size = 0x8000, scoped, tag = 'input window, operand 0']
    #allocation3 [shape = 'u8[16384]{0}', space=vmem, size = 0x4000, scoped, tag = 'input window, operand 3, single buffered']
    #allocation4 [shape = 's32[2]{0}', space=sflag, size = 0x8, scoped, tag = 'scoped memory for tpu_custom_call.1']
    #allocation5 [shape = 's32[2]{0}', space=sflag, size = 0x8, scoped, tag = 'scoped memory for tpu_custom_call.1']
    #allocation6 [shape = 'u8[16384]{0}', space=vmem, size = 0x4000, scoped, tag = 'input window, operand 6, single buffered']
    #allocation7 [shape = 's32[1]{0}', space=sflag, size = 0x4, scoped, tag = 'scoped memory for tpu_custom_call.1']
    #allocation8 [shape = 'u8[32768]{0}', space=vmem, size = 0x8000, scoped, tag = 'output window, operand 0']
    %14 = vsyncpa [#allocation4], 0
    %15 = vsyncpa [#allocation7], 0
    %16 = vsyncpa [#allocation5], 0
    %s17 = scalar_lea.sflag [#allocation5], 1
    %18 = vsyncpa %s17, 0
    loop: start=0, step=1, limit=4
    $region2: #{tpu_custom_call.1} parent=1 // loop_pre_header
      _
    $region3: #{tpu_custom_call.1} parent=1 // loop_header
      %s20 = sphi 0, %s24
      %p21 = scmp.ge.s32.totalorder %s20, 4
      %s30 = sphi 0, %s32
      %s33 = sphi 0, %s30
      %s34 = sphi 0, %s33
      %s50 = sphi 0, %s34
      %s56 = sphi 0, %s58
      %s59 = sphi 0, %s56
      %s60 = sphi 0, %s59
      %s76 = sphi 0, %s60
      %s82 = sphi 0, %s84
      %s85 = sphi 0, %s82
      %s86 = sphi 0, %s85
      %s102 = sphi 0, %s86
      %s106 = sphi 0, %s106
      %s108 = sphi 0, %s106
      %s109 = sphi 0, %s108
      %s123 = sphi 0, %s109
      %s127 = sphi 0, %s127
      %s129 = sphi 0, %s127
      %s130 = sphi 0, %s129
      %s144 = sphi 0, %s130
      %s148 = sphi 0, %s148
      %s150 = sphi 0, %s148
      %s151 = sphi 0, %s150
      %s165 = sphi 0, %s151
      %s169 = sphi 0, %s169
      %s171 = sphi 0, %s169
      %s172 = sphi 0, %s171
      %s186 = sphi 0, %s172
      %s190 = sphi 0, %s190
      %s192 = sphi 0, %s190
      %s193 = sphi 0, %s192
      %s207 = sphi 0, %s193
      %s211 = sphi 0, %s211
      %s213 = sphi 0, %s211
      %s214 = sphi 0, %s213
      %s228 = sphi 0, %s214
      %s234 = sphi 0, %s236
      %s237 = sphi 0, %s234
      %s238 = sphi 0, %s237
      %s254 = sphi 0, %s238
    $region4: #{tpu_custom_call.1} parent=1 // loop_header_branch
      %23 = sbr.rel (%p21) target = $region8
    $region5: #{tpu_custom_call.1} parent=1 // loop_body
      %s25 = ssub.s32 %s20, 1
      %s26 = ssub.s32 %s20, 2
      %s27 = sadd.s32 %s20, 1
      %s28 = ssub.s32 %s20, %s27
      %p29 = scmp.eq.s32.totalorder %s28, 0
      %s31 = sadd.s32 %s30, 1
      %s32 = scalar_select %p29, %s30, %s31
      %p35 = pneg %p29
      %p36 = scmp.eq.s32.totalorder %s20, 1
      %p37 = por %p35, %p36
      %p38 = scmp.ne.s32.totalorder %s30, %s33
      %p39 = scmp.eq.s32.totalorder %s20, 0
      %p40 = por %p38, %p39
      %p41 = scmp.ne.s32.totalorder %s30, %s33
      %p42 = scmp.eq.s32.totalorder %s25, 1
      %p43 = por %p41, %p42
      %p44 = scmp.ne.s32.totalorder %s33, %s34
      %p45 = scmp.eq.s32.totalorder %s25, 0
      %p46 = por %p44, %p45
      %p47 = scmp.ne.s32.totalorder %s33, %s34
      %p48 = scmp.eq.s32.totalorder %s26, 1
      %p49 = por %p47, %p48
      %p51 = scmp.ne.s32.totalorder %s34, %s50
      %p52 = scmp.eq.s32.totalorder %s26, 0
      %p53 = por %p51, %p52
      %s54 = ssub.s32 %s20, %s27
      %p55 = scmp.eq.s32.totalorder %s54, 0
      %s57 = sadd.s32 %s56, 1
      %s58 = scalar_select %p55, %s56, %s57
      %p61 = pneg %p55
      %p62 = scmp.eq.s32.totalorder %s20, 1
      %p63 = por %p61, %p62
      %p64 = scmp.ne.s32.totalorder %s56, %s59
      %p65 = scmp.eq.s32.totalorder %s20, 0
      %p66 = por %p64, %p65
      %p67 = scmp.ne.s32.totalorder %s56, %s59
      %p68 = scmp.eq.s32.totalorder %s25, 1
      %p69 = por %p67, %p68
      %p70 = scmp.ne.s32.totalorder %s59, %s60
      %p71 = scmp.eq.s32.totalorder %s25, 0
      %p72 = por %p70, %p71
      %p73 = scmp.ne.s32.totalorder %s59, %s60
      %p74 = scmp.eq.s32.totalorder %s26, 1
      %p75 = por %p73, %p74
      %p77 = scmp.ne.s32.totalorder %s60, %s76
      %p78 = scmp.eq.s32.totalorder %s26, 0
      %p79 = por %p77, %p78
      %s80 = ssub.s32 %s20, %s27
      %p81 = scmp.eq.s32.totalorder %s80, 0
      %s83 = sadd.s32 %s82, 1
      %s84 = scalar_select %p81, %s82, %s83
      %p87 = pneg %p81
      %p88 = scmp.eq.s32.totalorder %s20, 1
      %p89 = por %p87, %p88
      %p90 = scmp.ne.s32.totalorder %s82, %s85
      %p91 = scmp.eq.s32.totalorder %s20, 0
      %p92 = por %p90, %p91
      %p93 = scmp.ne.s32.totalorder %s82, %s85
      %p94 = scmp.eq.s32.totalorder %s25, 1
      %p95 = por %p93, %p94
      %p96 = scmp.ne.s32.totalorder %s85, %s86
      %p97 = scmp.eq.s32.totalorder %s25, 0
      %p98 = por %p96, %p97
      %p99 = scmp.ne.s32.totalorder %s85, %s86
      %p100 = scmp.eq.s32.totalorder %s26, 1
      %p101 = por %p99, %p100
      %p103 = scmp.ne.s32.totalorder %s86, %s102
      %p104 = scmp.eq.s32.totalorder %s26, 0
      %p105 = por %p103, %p104
      %s107 = sadd.s32 %s106, 1
      %p110 = scmp.eq.s32.totalorder %s20, 1
      %p111 = scmp.ne.s32.totalorder %s106, %s108
      %p112 = scmp.eq.s32.totalorder %s20, 0
      %p113 = por %p111, %p112
      %p114 = scmp.ne.s32.totalorder %s106, %s108
      %p115 = scmp.eq.s32.totalorder %s25, 1
      %p116 = por %p114, %p115
      %p117 = scmp.ne.s32.totalorder %s108, %s109
      %p118 = scmp.eq.s32.totalorder %s25, 0
      %p119 = por %p117, %p118
      %p120 = scmp.ne.s32.totalorder %s108, %s109
      %p121 = scmp.eq.s32.totalorder %s26, 1
      %p122 = por %p120, %p121
      %p124 = scmp.ne.s32.totalorder %s109, %s123
      %p125 = scmp.eq.s32.totalorder %s26, 0
      %p126 = por %p124, %p125
      %s128 = sadd.s32 %s127, 1
      %p131 = scmp.eq.s32.totalorder %s20, 1
      %p132 = scmp.ne.s32.totalorder %s127, %s129
      %p133 = scmp.eq.s32.totalorder %s20, 0
      %p134 = por %p132, %p133
      %p135 = scmp.ne.s32.totalorder %s127, %s129
      %p136 = scmp.eq.s32.totalorder %s25, 1
      %p137 = por %p135, %p136
      %p138 = scmp.ne.s32.totalorder %s129, %s130
      %p139 = scmp.eq.s32.totalorder %s25, 0
      %p140 = por %p138, %p139
      %p141 = scmp.ne.s32.totalorder %s129, %s130
      %p142 = scmp.eq.s32.totalorder %s26, 1
      %p143 = por %p141, %p142
      %p145 = scmp.ne.s32.totalorder %s130, %s144
      %p146 = scmp.eq.s32.totalorder %s26, 0
      %p147 = por %p145, %p146
      %s149 = sadd.s32 %s148, 1
      %p152 = scmp.eq.s32.totalorder %s20, 1
      %p153 = scmp.ne.s32.totalorder %s148, %s150
      %p154 = scmp.eq.s32.totalorder %s20, 0
      %p155 = por %p153, %p154
      %p156 = scmp.ne.s32.totalorder %s148, %s150
      %p157 = scmp.eq.s32.totalorder %s25, 1
      %p158 = por %p156, %p157
      %p159 = scmp.ne.s32.totalorder %s150, %s151
      %p160 = scmp.eq.s32.totalorder %s25, 0
      %p161 = por %p159, %p160
      %p162 = scmp.ne.s32.totalorder %s150, %s151
      %p163 = scmp.eq.s32.totalorder %s26, 1
      %p164 = por %p162, %p163
      %p166 = scmp.ne.s32.totalorder %s151, %s165
      %p167 = scmp.eq.s32.totalorder %s26, 0
      %p168 = por %p166, %p167
      %s170 = sadd.s32 %s169, 1
      %p173 = scmp.eq.s32.totalorder %s20, 1
      %p174 = scmp.ne.s32.totalorder %s169, %s171
      %p175 = scmp.eq.s32.totalorder %s20, 0
      %p176 = por %p174, %p175
      %p177 = scmp.ne.s32.totalorder %s169, %s171
      %p178 = scmp.eq.s32.totalorder %s25, 1
      %p179 = por %p177, %p178
      %p180 = scmp.ne.s32.totalorder %s171, %s172
      %p181 = scmp.eq.s32.totalorder %s25, 0
      %p182 = por %p180, %p181
      %p183 = scmp.ne.s32.totalorder %s171, %s172
      %p184 = scmp.eq.s32.totalorder %s26, 1
      %p185 = por %p183, %p184
      %p187 = scmp.ne.s32.totalorder %s172, %s186
      %p188 = scmp.eq.s32.totalorder %s26, 0
      %p189 = por %p187, %p188
      %s191 = sadd.s32 %s190, 1
      %p194 = scmp.eq.s32.totalorder %s20, 1
      %p195 = scmp.ne.s32.totalorder %s190, %s192
      %p196 = scmp.eq.s32.totalorder %s20, 0
      %p197 = por %p195, %p196
      %p198 = scmp.ne.s32.totalorder %s190, %s192
      %p199 = scmp.eq.s32.totalorder %s25, 1
      %p200 = por %p198, %p199
      %p201 = scmp.ne.s32.totalorder %s192, %s193
      %p202 = scmp.eq.s32.totalorder %s25, 0
      %p203 = por %p201, %p202
      %p204 = scmp.ne.s32.totalorder %s192, %s193
      %p205 = scmp.eq.s32.totalorder %s26, 1
      %p206 = por %p204, %p205
      %p208 = scmp.ne.s32.totalorder %s193, %s207
      %p209 = scmp.eq.s32.totalorder %s26, 0
      %p210 = por %p208, %p209
      %s212 = sadd.s32 %s211, 1
      %p215 = scmp.eq.s32.totalorder %s20, 1
      %p216 = scmp.ne.s32.totalorder %s211, %s213
      %p217 = scmp.eq.s32.totalorder %s20, 0
      %p218 = por %p216, %p217
      %p219 = scmp.ne.s32.totalorder %s211, %s213
      %p220 = scmp.eq.s32.totalorder %s25, 1
      %p221 = por %p219, %p220
      %p222 = scmp.ne.s32.totalorder %s213, %s214
      %p223 = scmp.eq.s32.totalorder %s25, 0
      %p224 = por %p222, %p223
      %p225 = scmp.ne.s32.totalorder %s213, %s214
      %p226 = scmp.eq.s32.totalorder %s26, 1
      %p227 = por %p225, %p226
      %p229 = scmp.ne.s32.totalorder %s214, %s228
      %p230 = scmp.eq.s32.totalorder %s26, 0
      %p231 = por %p229, %p230
      %s232 = ssub.s32 %s20, %s27
      %p233 = scmp.eq.s32.totalorder %s232, 0
      %s235 = sadd.s32 %s234, 1
      %s236 = scalar_select %p233, %s234, %s235
      %p239 = pneg %p233
      %p240 = scmp.eq.s32.totalorder %s20, 1
      %p241 = por %p239, %p240
      %p242 = scmp.ne.s32.totalorder %s234, %s237
      %p243 = scmp.eq.s32.totalorder %s20, 0
      %p244 = por %p242, %p243
      %p245 = scmp.ne.s32.totalorder %s234, %s237
      %p246 = scmp.eq.s32.totalorder %s25, 1
      %p247 = por %p245, %p246
      %p248 = scmp.ne.s32.totalorder %s237, %s238
      %p249 = scmp.eq.s32.totalorder %s25, 0
      %p250 = por %p248, %p249
      %p251 = scmp.ne.s32.totalorder %s237, %s238
      %p252 = scmp.eq.s32.totalorder %s26, 1
      %p253 = por %p251, %p252
      %p255 = scmp.ne.s32.totalorder %s238, %s254
      %p256 = scmp.eq.s32.totalorder %s26, 0
      %p257 = por %p255, %p256
      %p258 = scmp.le.s32.totalorder 1, %s20
      %p259 = scmp.lt.s32.totalorder %s20, 3
      %p260 = pnand %p258, %p259
      %p261 = pneg %p260
      // Predicated region
      $region9: #{tpu_custom_call.1} parent=5 // pred_check
        _
      $region10: #{tpu_custom_call.1} parent=5 // pred_check_branch
        %263 = sbr.rel (%p260) target = $region12
      $region11: #{tpu_custom_call.1} parent=5 // pred_region
        %s264 = ssub.s32 %s20, 1
        // Predicated region
        $region13: #{tpu_custom_call.1} parent=11 // pred_check
          %p265 = pneg %p119
        $region14: #{tpu_custom_call.1} parent=11 // pred_check_branch
          %267 = sbr.rel (%p265) target = $region16
        $region15: #{tpu_custom_call.1} parent=11 // pred_region
          %s269 = ssub.s32 512, 512
          %270 = vsyncadd [#allocation4], %s269
          %s271 = sshll.u32 [#allocation3], 4
          %s272 = int_to_ptr.vmem [resolvable:$true] %s271
          %277 = dma.hbm_to_vmem [thread:$0]  %s3, 512, %s272, [#allocation4], 256, 256, 16
        $region16: #{tpu_custom_call.1} parent=11 // pred_fallthru
          _
        // Predicated region
        $region17: #{tpu_custom_call.1} parent=11 // pred_check
          %p278 = pneg %p140
        $region18: #{tpu_custom_call.1} parent=11 // pred_check_branch
          %280 = sbr.rel (%p278) target = $region20
        $region19: #{tpu_custom_call.1} parent=11 // pred_region
          _
        $region20: #{tpu_custom_call.1} parent=11 // pred_fallthru
          _
        // Predicated region
        $region21: #{tpu_custom_call.1} parent=11 // pred_check
          %p281 = pneg %p161
        $region22: #{tpu_custom_call.1} parent=11 // pred_check_branch
          %283 = sbr.rel (%p281) target = $region24
        $region23: #{tpu_custom_call.1} parent=11 // pred_region
          _
        $region24: #{tpu_custom_call.1} parent=11 // pred_fallthru
          _
        // Predicated region
        $region25: #{tpu_custom_call.1} parent=11 // pred_check
          %p284 = pneg %p182
        $region26: #{tpu_custom_call.1} parent=11 // pred_check_branch
          %286 = sbr.rel (%p284) target = $region28
        $region27: #{tpu_custom_call.1} parent=11 // pred_region
          %s288 = ssub.s32 512, 512
          %289 = vsyncadd [#allocation7], %s288
          %s290 = sshll.u32 [#allocation6], 4
          %s291 = int_to_ptr.vmem [resolvable:$true] %s290
          %296 = dma.hbm_to_vmem [thread:$0]  %s6, 512, %s291, [#allocation7], 256, 256, 16
        $region28: #{tpu_custom_call.1} parent=11 // pred_fallthru
          _
        // Predicated region
        $region29: #{tpu_custom_call.1} parent=11 // pred_check
          %p297 = pneg %p203
        $region30: #{tpu_custom_call.1} parent=11 // pred_check_branch
          %299 = sbr.rel (%p297) target = $region32
        $region31: #{tpu_custom_call.1} parent=11 // pred_region
          _
        $region32: #{tpu_custom_call.1} parent=11 // pred_fallthru
          _
        // Predicated region
        $region33: #{tpu_custom_call.1} parent=11 // pred_check
          %p300 = pneg %p224
        $region34: #{tpu_custom_call.1} parent=11 // pred_check_branch
          %302 = sbr.rel (%p300) target = $region36
        $region35: #{tpu_custom_call.1} parent=11 // pred_region
          _
        $region36: #{tpu_custom_call.1} parent=11 // pred_fallthru
          _
      $region12: #{tpu_custom_call.1} parent=5 // pred_fallthru
        _
      %p303 = scmp.lt.s32.totalorder %s20, 2
      // Predicated region
      $region37: #{tpu_custom_call.1} parent=5 // pred_check
        %p304 = pneg %p303
      $region38: #{tpu_custom_call.1} parent=5 // pred_check_branch
        %306 = sbr.rel (%p304) target = $region40
      $region39: #{tpu_custom_call.1} parent=5 // pred_region
        // Predicated region
        $region41: #{tpu_custom_call.1} parent=39 // pred_check
          %p307 = pneg %p40
        $region42: #{tpu_custom_call.1} parent=39 // pred_check_branch
          %309 = sbr.rel (%p307) target = $region44
        $region43: #{tpu_custom_call.1} parent=39 // pred_region
          %s310 = sand.u32 %s30, 1
          %s311 = sand.u32 %s30, 1
          %s312 = smul.addr %s311, 32
          %s313 = scalar_lea.vmem [#allocation2], %s312
          %s314 = smul.u32 2, %s20
          %s315 = smul.addr %s314, 8
          %s316 = scalar_lea.vmem %s0, %s315
          // Predicated region
          $region45: #{tpu_custom_call.1} parent=43 // pred_check
            _
          $region46: #{tpu_custom_call.1} parent=43 // pred_check_branch
            %318 = sbr.rel (0) target = $region48
          $region47: #{tpu_custom_call.1} parent=43 // pred_region
            // Predicated region
            $region49: #{tpu_custom_call.1} parent=47 // pred_check
              _
            $region50: #{tpu_custom_call.1} parent=47 // pred_check_branch
              %320 = sbr.rel (0) target = $region52
            $region51: #{tpu_custom_call.1} parent=47 // pred_region
              loop: start=0, step=1, limit=1
              $region53: #{tpu_custom_call.1} parent=51 // loop_pre_header
                _
              $region54: #{tpu_custom_call.1} parent=51 // loop_header
                %s322 = sphi 0, %s326
                %p323 = scmp.ge.s32.totalorder %s322, 1
                %s327 = sphi %s316, %s316
                %s328 = sphi %s313, %s313
              $region55: #{tpu_custom_call.1} parent=51 // loop_header_branch
                %325 = sbr.rel (%p323) target = $region59
              $region56: #{tpu_custom_call.1} parent=51 // loop_body
                %v329 = vld [vmem:[%s327] sm:$0xff]
                %330 = vst [vmem:[%s328] sm:$0xff] %v329
                %v331 = vld [vmem:[%s327 + $0x8] sm:$0xff]
                %332 = vst [vmem:[%s328 + $0x8] sm:$0xff] %v331
                %v333 = vld [vmem:[%s327 + $0x20] sm:$0xff]
                %334 = vst [vmem:[%s328 + $0x10] sm:$0xff] %v333
                %v335 = vld [vmem:[%s327 + $0x28] sm:$0xff]
                %336 = vst [vmem:[%s328 + $0x18] sm:$0xff] %v335
              $region57: #{tpu_custom_call.1} parent=51 // loop_footer
                %s326 = sadd.s32 1, %s322
              $region58: #{tpu_custom_call.1} parent=51 // loop_footer_branch
                %321 = sbr.rel target = $region54
              $region59: #{tpu_custom_call.1} parent=51 // loop_exit
                _
            $region52: #{tpu_custom_call.1} parent=47 // pred_fallthru
              _
            // Predicated region
            $region60: #{tpu_custom_call.1} parent=47 // pred_check
              _
            $region61: #{tpu_custom_call.1} parent=47 // pred_check_branch
              %338 = sbr.rel target = $region63
            $region62: #{tpu_custom_call.1} parent=47 // pred_region
              _
            $region63: #{tpu_custom_call.1} parent=47 // pred_fallthru
              _
          $region48: #{tpu_custom_call.1} parent=43 // pred_fallthru
            _
          %339 = vnop
        $region44: #{tpu_custom_call.1} parent=39 // pred_fallthru
          _
        // Predicated region
        $region64: #{tpu_custom_call.1} parent=39 // pred_check
          %p340 = pneg %p66
        $region65: #{tpu_custom_call.1} parent=39 // pred_check_branch
          %342 = sbr.rel (%p340) target = $region67
        $region66: #{tpu_custom_call.1} parent=39 // pred_region
          %s343 = smul.u32 2, %s20
          %p344 = scmp.lt.s32.totalorder %s343, 3
          %s345 = scalar_select %p344, %s343, 3
          %s346 = scalar_lea.vmem %s1, %s345
          %s347 = smul.u32 2, %s20
        $region67: #{tpu_custom_call.1} parent=39 // pred_fallthru
          _
        // Predicated region
        $region68: #{tpu_custom_call.1} parent=39 // pred_check
          %p348 = pneg %p92
        $region69: #{tpu_custom_call.1} parent=39 // pred_check_branch
          %350 = sbr.rel (%p348) target = $region71
        $region70: #{tpu_custom_call.1} parent=39 // pred_region
          %s351 = smul.u32 2, %s20
          %p352 = scmp.lt.s32.totalorder %s351, 3
          %s353 = scalar_select %p352, %s351, 3
          %s354 = scalar_lea.vmem %s2, %s353
          %s355 = smul.u32 2, %s20
        $region71: #{tpu_custom_call.1} parent=39 // pred_fallthru
          _
      $region40: #{tpu_custom_call.1} parent=5 // pred_fallthru
        _
      %p356 = scmp.le.s32.totalorder 1, %s20
      %p357 = scmp.lt.s32.totalorder %s20, 3
      %p358 = pnand %p356, %p357
      %p359 = pneg %p358
      // Predicated region
      $region72: #{tpu_custom_call.1} parent=5 // pred_check
        _
      $region73: #{tpu_custom_call.1} parent=5 // pred_check_branch
        %361 = sbr.rel (%p358) target = $region75
      $region74: #{tpu_custom_call.1} parent=5 // pred_region
        %s362 = ssub.s32 %s20, 1
        %s363 = sand.u32 %s33, 1
        %s364 = sand.u32 %s33, 1
        %s365 = smul.addr %s364, 32
        %s366 = scalar_lea.vmem [#allocation2], %s365
        // Predicated region
        $region76: #{tpu_custom_call.1} parent=74 // pred_check
          %p367 = pneg %p46
        $region77: #{tpu_custom_call.1} parent=74 // pred_check_branch
          %369 = sbr.rel (%p367) target = $region79
        $region78: #{tpu_custom_call.1} parent=74 // pred_region
          _
        $region79: #{tpu_custom_call.1} parent=74 // pred_fallthru
          _
        // Predicated region
        $region80: #{tpu_custom_call.1} parent=74 // pred_check
          %p370 = pneg %p119
        $region81: #{tpu_custom_call.1} parent=74 // pred_check_branch
          %372 = sbr.rel (%p370) target = $region83
        $region82: #{tpu_custom_call.1} parent=74 // pred_region
          %373 = dma.done [#allocation4], 512
        $region83: #{tpu_custom_call.1} parent=74 // pred_fallthru
          _
        // Predicated region
        $region84: #{tpu_custom_call.1} parent=74 // pred_check
          %p374 = pneg %p182
        $region85: #{tpu_custom_call.1} parent=74 // pred_check_branch
          %376 = sbr.rel (%p374) target = $region87
        $region86: #{tpu_custom_call.1} parent=74 // pred_region
          %377 = dma.done [#allocation7], 512
        $region87: #{tpu_custom_call.1} parent=74 // pred_fallthru
          _
        %s378 = sand.u32 %s33, 1
        %s379 = sand.u32 %s33, 1
        %s380 = smul.addr %s379, 32
        %s381 = scalar_lea.vmem [#allocation2], %s380
        %p382 = pneg %p46
        %p383 = pneg %p43
        %s384 = smul.u32 2, %s25
        %p385 = scmp.lt.s32.totalorder %s384, 3
        %s386 = scalar_select %p385, %s384, 3
        %s387 = scalar_lea.vmem %s1, %s386
        %p388 = pneg %p72
        %p389 = pneg %p69
        %s390 = smul.u32 2, %s25
        %p391 = scmp.lt.s32.totalorder %s390, 3
        %s392 = scalar_select %p391, %s390, 3
        %s393 = scalar_lea.vmem %s2, %s392
        %p394 = pneg %p98
        %p395 = pneg %p95
        %p396 = pneg %p119
        %p397 = pneg %p116
        %p398 = pneg %p140
        %p399 = pneg %p137
        %p400 = pneg %p161
        %p401 = pneg %p158
        %p402 = pneg %p182
        %p403 = pneg %p179
        %p404 = pneg %p203
        %p405 = pneg %p200
        %p406 = pneg %p224
        %p407 = pneg %p221
        %p408 = pneg %p250
        %p409 = pneg %p247
        %s410 = sand.u32 %s237, 1
        %s411 = scalar_lea.sflag [#allocation5], %s410
        %s412 = sand.u32 %s237, 1
        %s413 = smul.addr %s412, 32
        %s414 = scalar_lea.vmem [#allocation8], %s413
        %s415 = smul.u32 2, %s25
        %s416 = smul.u32 2, %s25
        %p417 = scmp.lt.s32.totalorder %s416, 3
        %s418 = scalar_select %p417, %s416, 3
        %s419 = scalar_lea.vmem %s1, %s418
        %s420 = smul.u32 2, %s25
        %s421 = smul.u32 2, %s25
        %p422 = scmp.lt.s32.totalorder %s421, 3
        %s423 = scalar_select %p422, %s421, 3
        %s424 = scalar_lea.vmem %s2, %s423
        %s425 = smul.u32 2, %s25
        %s426 = smul.u32 2, %s25
        %v427 = vld [vmem:[%s366] sm:$0xff]
        %v428 = vld [vmem:[%s366 + $0x8] sm:$0xff]
        %v429 = vld [vmem:[%s366 + $0x10] sm:$0xff]
        %v430 = vld [vmem:[%s366 + $0x18] sm:$0xff]
        %v431 = vld [vmem:[%s419] sm:$0x3]
        %v432 = vld [vmem:[%s424] sm:$0x3]
        %435 = vrot.lane.b32.xlu0 %v428, 17
        %v436 = vpop.permute.xlu0 %435
        %437 = vrot.lane.b32.xlu0 %v430, 17
        %v438 = vpop.permute.xlu0 %437
        %443 = vrot.lane.b32.xlu0 %v427, 17
        %v444 = vpop.permute.xlu0 %443
        %445 = vrot.lane.b32.xlu0 %v429, 17
        %v446 = vpop.permute.xlu0 %445
        %vm447 = vcmask 138240
        %v448 = vsel %vm447, %v444, %v436
        %v449 = vsel %vm447, %v446, %v438
        %v454 = vsel %vm447, %v436, %v444
        %v455 = vsel %vm447, %v438, %v446
        %v456 = vadd.s32 %v431, 4294967295
        %v457 = vadd.s32 %v432, 4294967295
        %vm458 = vcmp.ge.s32.totalorder %v456, 0
        %vm459 = vcmp.lt.s32.totalorder %v456, 16
        %vm460 = vmand %vm458, %vm459
        %vm461 = vcmp.ge.s32.totalorder %v457, 0
        %vm462 = vmand %vm460, %vm461
        %vm463 = vcmp.lt.s32.totalorder %v457, 16
        %vm464 = vmand %vm462, %vm463
        %v465 = vsel %vm464, 1, 0
        %v466 = vlaneseq
        %v467 = vshrl.u32 %v466, 7
        %v468 = vsub.s32 0, %v467
        %v469 = vrot.slane %v465, %v468
        %v470 = vlaneseq
        %v471 = vshrl.u32 %v470, 7
        %v472 = vsub.s32 1, %v471
        %v473 = vrot.slane %v465, %v472
        %vm474 = vcmp.eq.s32.totalorder %v469, 1
        %vm475 = vcmp.eq.s32.totalorder %v473, 1
        %v476 = vsel %vm474, %v454, 0.0
        %v477 = vsel %vm475, %v448, 0.0
        %v478 = vsel %vm474, %v455, 0.0
        %v479 = vsel %vm475, %v449, 0.0
        %480 = vrot.lane.b32.xlu0 %v428, 16
        %v481 = vpop.permute.xlu0 %480
        %482 = vrot.lane.b32.xlu0 %v430, 16
        %v483 = vpop.permute.xlu0 %482
        %486 = vrot.lane.b32.xlu0 %v427, 16
        %v487 = vpop.permute.xlu0 %486
        %488 = vrot.lane.b32.xlu0 %v429, 16
        %v489 = vpop.permute.xlu0 %488
        %vm490 = vcmask 130048
        %v491 = vsel %vm490, %v487, %v481
        %v492 = vsel %vm490, %v489, %v483
        %v497 = vsel %vm490, %v481, %v487
        %v498 = vsel %vm490, %v483, %v489
        %vm499 = vcmp.ge.s32.totalorder %v432, 0
        %vm500 = vmand %vm460, %vm499
        %vm501 = vcmp.lt.s32.totalorder %v432, 16
        %vm502 = vmand %vm500, %vm501
        %v503 = vsel %vm502, 1, 0
        %v504 = vlaneseq
        %v505 = vshrl.u32 %v504, 7
        %v506 = vsub.s32 0, %v505
        %v507 = vrot.slane %v503, %v506
        %v508 = vlaneseq
        %v509 = vshrl.u32 %v508, 7
        %v510 = vsub.s32 1, %v509
        %v511 = vrot.slane %v503, %v510
        %vm512 = vcmp.eq.s32.totalorder %v507, 1
        %vm513 = vcmp.eq.s32.totalorder %v511, 1
        %v514 = vsel %vm512, %v497, 0.0
        %v515 = vsel %vm513, %v491, 0.0
        %v516 = vsel %vm512, %v498, 0.0
        %v517 = vsel %vm513, %v492, 0.0
        %518 = vrot.lane.b32.xlu0 %v428, 15
        %v519 = vpop.permute.xlu0 %518
        %520 = vrot.lane.b32.xlu0 %v430, 15
        %v521 = vpop.permute.xlu0 %520
        %524 = vrot.lane.b32.xlu0 %v427, 15
        %v525 = vpop.permute.xlu0 %524
        %526 = vrot.lane.b32.xlu0 %v429, 15
        %v527 = vpop.permute.xlu0 %526
        %vm528 = vcmask 121856
        %v529 = vsel %vm528, %v525, %v519
        %v530 = vsel %vm528, %v527, %v521
        %v535 = vsel %vm528, %v519, %v525
        %v536 = vsel %vm528, %v521, %v527
        %v537 = vadd.s32 %v432, 1
        %vm538 = vcmp.ge.s32.totalorder %v537, 0
        %vm539 = vmand %vm460, %vm538
        %vm540 = vcmp.lt.s32.totalorder %v537, 16
        %vm541 = vmand %vm539, %vm540
        %v542 = vsel %vm541, 1, 0
        %v543 = vlaneseq
        %v544 = vshrl.u32 %v543, 7
        %v545 = vsub.s32 0, %v544
        %v546 = vrot.slane %v542, %v545
        %v547 = vlaneseq
        %v548 = vshrl.u32 %v547, 7
        %v549 = vsub.s32 1, %v548
        %v550 = vrot.slane %v542, %v549
        %vm551 = vcmp.eq.s32.totalorder %v546, 1
        %vm552 = vcmp.eq.s32.totalorder %v550, 1
        %v553 = vsel %vm551, %v535, 0.0
        %v554 = vsel %vm552, %v529, 0.0
        %v555 = vsel %vm551, %v536, 0.0
        %v556 = vsel %vm552, %v530, 0.0
        %557 = vrot.lane.b32.xlu0 %v428, 1
        %v558 = vpop.permute.xlu0 %557
        %559 = vrot.lane.b32.xlu0 %v430, 1
        %v560 = vpop.permute.xlu0 %559
        %563 = vrot.lane.b32.xlu0 %v427, 1
        %v564 = vpop.permute.xlu0 %563
        %565 = vrot.lane.b32.xlu0 %v429, 1
        %v566 = vpop.permute.xlu0 %565
        %vm567 = vcmask 7168
        %v568 = vsel %vm567, %v564, %v558
        %v569 = vsel %vm567, %v566, %v560
        %v574 = vsel %vm567, %v558, %v564
        %v575 = vsel %vm567, %v560, %v566
        %vm576 = vcmp.ge.s32.totalorder %v431, 0
        %vm577 = vcmp.lt.s32.totalorder %v431, 16
        %vm578 = vmand %vm576, %vm577
        %vm579 = vmand %vm578, %vm461
        %vm580 = vmand %vm579, %vm463
        %v581 = vsel %vm580, 1, 0
        %v582 = vlaneseq
        %v583 = vshrl.u32 %v582, 7
        %v584 = vsub.s32 0, %v583
        %v585 = vrot.slane %v581, %v584
        %v586 = vlaneseq
        %v587 = vshrl.u32 %v586, 7
        %v588 = vsub.s32 1, %v587
        %v589 = vrot.slane %v581, %v588
        %vm590 = vcmp.eq.s32.totalorder %v585, 1
        %vm591 = vcmp.eq.s32.totalorder %v589, 1
        %v592 = vsel %vm590, %v574, 0.0
        %v593 = vsel %vm591, %v568, 0.0
        %v594 = vsel %vm590, %v575, 0.0
        %v595 = vsel %vm591, %v569, 0.0
        %596 = vrot.lane.b32.xlu0 %v427, 127
        %v597 = vpop.permute.xlu0 %596
        %598 = vrot.lane.b32.xlu0 %v428, 127
        %v599 = vpop.permute.xlu0 %598
        %600 = vrot.lane.b32.xlu0 %v429, 127
        %v601 = vpop.permute.xlu0 %600
        %602 = vrot.lane.b32.xlu0 %v430, 127
        %v603 = vpop.permute.xlu0 %602
        %vm604 = vcmask 1039360
        %v605 = vsel %vm604, %v597, %v599
        %v606 = vsel %vm604, %v601, %v603
        %v613 = vsel %vm604, %v599, %v597
        %v614 = vsel %vm604, %v603, %v601
        %vm615 = vmand %vm578, %vm538
        %vm616 = vmand %vm615, %vm540
        %v617 = vsel %vm616, 1, 0
        %v618 = vlaneseq
        %v619 = vshrl.u32 %v618, 7
        %v620 = vsub.s32 0, %v619
        %v621 = vrot.slane %v617, %v620
        %v622 = vlaneseq
        %v623 = vshrl.u32 %v622, 7
        %v624 = vsub.s32 1, %v623
        %v625 = vrot.slane %v617, %v624
        %vm626 = vcmp.eq.s32.totalorder %v621, 1
        %vm627 = vcmp.eq.s32.totalorder %v625, 1
        %v628 = vsel %vm626, %v605, 0.0
        %v629 = vsel %vm627, %v613, 0.0
        %v630 = vsel %vm626, %v606, 0.0
        %v631 = vsel %vm627, %v614, 0.0
        %632 = vrot.lane.b32.xlu0 %v427, 113
        %v633 = vpop.permute.xlu0 %632
        %634 = vrot.lane.b32.xlu0 %v428, 113
        %v635 = vpop.permute.xlu0 %634
        %636 = vrot.lane.b32.xlu0 %v429, 113
        %v637 = vpop.permute.xlu0 %636
        %638 = vrot.lane.b32.xlu0 %v430, 113
        %v639 = vpop.permute.xlu0 %638
        %vm640 = vcmask 924672
        %v641 = vsel %vm640, %v633, %v635
        %v642 = vsel %vm640, %v637, %v639
        %v649 = vsel %vm640, %v635, %v633
        %v650 = vsel %vm640, %v639, %v637
        %v651 = vadd.s32 %v431, 1
        %vm652 = vcmp.ge.s32.totalorder %v651, 0
        %vm653 = vcmp.lt.s32.totalorder %v651, 16
        %vm654 = vmand %vm652, %vm653
        %vm655 = vmand %vm654, %vm461
        %vm656 = vmand %vm655, %vm463
        %v657 = vsel %vm656, 1, 0
        %v658 = vlaneseq
        %v659 = vshrl.u32 %v658, 7
        %v660 = vsub.s32 0, %v659
        %v661 = vrot.slane %v657, %v660
        %v662 = vlaneseq
        %v663 = vshrl.u32 %v662, 7
        %v664 = vsub.s32 1, %v663
        %v665 = vrot.slane %v657, %v664
        %vm666 = vcmp.eq.s32.totalorder %v661, 1
        %vm667 = vcmp.eq.s32.totalorder %v665, 1
        %v668 = vsel %vm666, %v641, 0.0
        %v669 = vsel %vm667, %v649, 0.0
        %v670 = vsel %vm666, %v642, 0.0
        %v671 = vsel %vm667, %v650, 0.0
        %672 = vrot.lane.b32.xlu0 %v427, 112
        %v673 = vpop.permute.xlu0 %672
        %674 = vrot.lane.b32.xlu0 %v428, 112
        %v675 = vpop.permute.xlu0 %674
        %676 = vrot.lane.b32.xlu0 %v429, 112
        %v677 = vpop.permute.xlu0 %676
        %678 = vrot.lane.b32.xlu0 %v430, 112
        %v679 = vpop.permute.xlu0 %678
        %vm680 = vcmask 916480
        %v681 = vsel %vm680, %v673, %v675
        %v682 = vsel %vm680, %v677, %v679
        %v689 = vsel %vm680, %v675, %v673
        %v690 = vsel %vm680, %v679, %v677
        %vm691 = vmand %vm654, %vm499
        %vm692 = vmand %vm691, %vm501
        %v693 = vsel %vm692, 1, 0
        %v694 = vlaneseq
        %v695 = vshrl.u32 %v694, 7
        %v696 = vsub.s32 0, %v695
        %v697 = vrot.slane %v693, %v696
        %v698 = vlaneseq
        %v699 = vshrl.u32 %v698, 7
        %v700 = vsub.s32 1, %v699
        %v701 = vrot.slane %v693, %v700
        %vm702 = vcmp.eq.s32.totalorder %v697, 1
        %vm703 = vcmp.eq.s32.totalorder %v701, 1
        %v704 = vsel %vm702, %v681, 0.0
        %v705 = vsel %vm703, %v689, 0.0
        %v706 = vsel %vm702, %v682, 0.0
        %v707 = vsel %vm703, %v690, 0.0
        %708 = vrot.lane.b32.xlu0 %v427, 111
        %v709 = vpop.permute.xlu0 %708
        %710 = vrot.lane.b32.xlu0 %v428, 111
        %v711 = vpop.permute.xlu0 %710
        %712 = vrot.lane.b32.xlu0 %v429, 111
        %v713 = vpop.permute.xlu0 %712
        %714 = vrot.lane.b32.xlu0 %v430, 111
        %v715 = vpop.permute.xlu0 %714
        %vm716 = vcmask 908288
        %v717 = vsel %vm716, %v709, %v711
        %v718 = vsel %vm716, %v713, %v715
        %v725 = vsel %vm716, %v711, %v709
        %v726 = vsel %vm716, %v715, %v713
        %vm727 = vmand %vm654, %vm538
        %vm728 = vmand %vm727, %vm540
        %v729 = vsel %vm728, 1, 0
        %v730 = vlaneseq
        %v731 = vshrl.u32 %v730, 7
        %v732 = vsub.s32 0, %v731
        %v733 = vrot.slane %v729, %v732
        %v734 = vlaneseq
        %v735 = vshrl.u32 %v734, 7
        %v736 = vsub.s32 1, %v735
        %v737 = vrot.slane %v729, %v736
        %vm738 = vcmp.eq.s32.totalorder %v733, 1
        %vm739 = vcmp.eq.s32.totalorder %v737, 1
        %v740 = vsel %vm738, %v717, 0.0
        %v741 = vsel %vm739, %v725, 0.0
        %v742 = vsel %vm738, %v718, 0.0
        %v743 = vsel %vm739, %v726, 0.0
        %v744 = vld [vmem:[#allocation3] sm:$0xff]
        %v745 = vld [vmem:[#allocation3 + $0x8] sm:$0xff]
        %v746 = vld [vmem:[#allocation3 + $0x10] sm:$0xff]
        %v747 = vld [vmem:[#allocation3 + $0x18] sm:$0xff]
        %v749 = vsel %vm490, %v745, 0
        %v752 = vsel %vm490, %v747, 0
        %754 = vmatprep.subr.mxu0 %v477
        %755 = vmatpush1.msra.mxu0 %v476
        %756 = vmatprep.subr.mxu0 %v479
        %757 = vmatpush1.msra.mxu0 %v478
        %758 = vmatprep.subr.mxu0 %v515
        %759 = vmatpush1.msra.mxu0 %v514
        %760 = vmatprep.subr.mxu0 %v517
        %761 = vmatpush1.msra.mxu0 %v516
        %762 = vmatprep.subr.mxu0 %v554
        %763 = vmatpush1.msra.mxu0 %v553
        %764 = vmatprep.subr.mxu0 %v556
        %765 = vmatpush1.msra.mxu0 %v555
        %766 = vmatprep.subr.mxu0 %v593
        %767 = vmatpush1.msra.mxu0 %v592
        %768 = vmatprep.subr.mxu0 %v595
        %769 = vmatpush1.msra.mxu0 %v594
        %770 = vmatprep.subr.mxu0 %v428
        %771 = vmatpush1.msra.mxu0 %v427
        %772 = vmatprep.subr.mxu0 %v430
        %773 = vmatpush1.msra.mxu0 %v429
        %774 = vmatprep.subr.mxu0 %v629
        %775 = vmatpush1.msra.mxu0 %v628
        %776 = vmatprep.subr.mxu0 %v631
        %777 = vmatpush1.msra.mxu0 %v630
        %778 = vmatprep.subr.mxu0 %v669
        %779 = vmatpush1.msra.mxu0 %v668
        %780 = vmatprep.subr.mxu0 %v671
        %781 = vmatpush1.msra.mxu0 %v670
        %782 = vmatprep.subr.mxu0 %v705
        %783 = vmatpush1.msra.mxu0 %v704
        %784 = vmatprep.subr.mxu0 %v707
        %785 = vmatpush1.msra.mxu0 %v706
        %786 = vmatprep.subr.mxu0 %v741
        %787 = vmatpush1.msra.mxu0 %v740
        %788 = vmatprep.subr.mxu0 %v743
        %789 = vmatpush1.msra.mxu0 %v742
        %790 = vmatprep.subr.mxu0 0.0
        %791 = vmatpush1.msra.mxu0 0.0
        %792 = vmatprep.subr.mxu0 0.0
        %793 = vmatpush1.msra.mxu0 0.0
        %794 = vmatprep.subr.mxu0 0.0
        %795 = vmatpush1.msra.mxu0 0.0
        %796 = vmatprep.subr.mxu0 0.0
        %797 = vmatpush1.msra.mxu0 0.0
        %798 = vmatprep.subr.mxu0 0.0
        %799 = vmatpush1.msra.mxu0 0.0
        %800 = vmatprep.subr.mxu0 0.0
        %801 = vmatpush1.msra.mxu0 0.0
        %802 = vmatprep.subr.mxu0 0.0
        %803 = vmatpush1.msra.mxu0 0.0
        %804 = vmatprep.subr.mxu0 0.0
        %805 = vmatpush1.msra.mxu0 0.0
        %806 = vmatprep.subr.mxu0 0.0
        %807 = vmatpush1.msra.mxu0 0.0
        %808 = vmatprep.subr.mxu0 0.0
        %809 = vmatpush1.msra.mxu0 0.0
        %810 = vmatprep.subr.mxu0 0.0
        %811 = vmatpush1.msra.mxu0 0.0
        %812 = vmatprep.subr.mxu0 0.0
        %813 = vmatpush1.msra.mxu0 0.0
        %814 = vmatprep.subr.mxu0 0.0
        %815 = vmatpush1.msra.mxu0 0.0
        %816 = vmatprep.subr.mxu0 0.0
        %817 = vmatpush1.msra.mxu0 0.0
        %818 = vmatprep.mubr.f32.mxu0 %v749
        %819 = vmatmul.mubr.f32.gmra.mrb[0].mxu0 %v744
        %v820 = vpop.f32.mrb[0].mxu0
        %v821 = vadd.f32 0.0, %v820
        %v822 = vpop.f32.mrb[0].mxu0
        %v823 = vadd.f32 0.0, %v822
        %824 = vmatprep.mubr.f32.mxu0 %v752
        %825 = vmatmul.mubr.f32.gmra.mrb[0].mxu0 %v746
        %v826 = vpop.f32.mrb[0].mxu0
        %v827 = vadd.f32 0.0, %v826
        %v828 = vpop.f32.mrb[0].mxu0
        %v829 = vadd.f32 0.0, %v828
        %830 = vdwg.mxu0
        %v831 = vld [vmem:[%s4] sm:$0xff]
        %v832 = vld [vmem:[%s4 + $0x8] sm:$0xff]
        %834 = vset.pattern.permute.xlu0 0
        %835 = vperm.xlu0 %834, %v831
        %v836 = vpop.permute.xlu0 %835
        %839 = vset.pattern.permute.xlu0 0
        %840 = vperm.xlu0 %839, %v832
        %v841 = vpop.permute.xlu0 %840
        %v843 = vmul.f32 %v821, %v836
        %v844 = vmul.f32 %v823, %v836
        %v845 = vmul.f32 %v827, %v841
        %v846 = vmul.f32 %v829, %v841
        %v847 = vld [vmem:[%s5] sm:$0xff]
        %v848 = vld [vmem:[%s5 + $0x8] sm:$0xff]
        %850 = vset.pattern.permute.xlu0 0
        %851 = vperm.xlu0 %850, %v847
        %v852 = vpop.permute.xlu0 %851
        %855 = vset.pattern.permute.xlu0 0
        %856 = vperm.xlu0 %855, %v848
        %v857 = vpop.permute.xlu0 %856
        %v859 = vadd.f32 %v843, %v852
        %v860 = vadd.f32 %v844, %v852
        %v861 = vadd.f32 %v845, %v857
        %v862 = vadd.f32 %v846, %v857
        %v863 = vmax.f32 %v859, 0.0
        %v864 = vmax.f32 %v860, 0.0
        %v865 = vmax.f32 %v861, 0.0
        %v866 = vmax.f32 %v862, 0.0
        %869 = vrot.lane.b32.xlu0 %v864, 17
        %v870 = vpop.permute.xlu0 %869
        %871 = vrot.lane.b32.xlu0 %v866, 17
        %v872 = vpop.permute.xlu0 %871
        %877 = vrot.lane.b32.xlu0 %v863, 17
        %v878 = vpop.permute.xlu0 %877
        %879 = vrot.lane.b32.xlu0 %v865, 17
        %v880 = vpop.permute.xlu0 %879
        %v881 = vsel %vm447, %v878, %v870
        %v882 = vsel %vm447, %v880, %v872
        %v887 = vsel %vm447, %v870, %v878
        %v888 = vsel %vm447, %v872, %v880
        %v889 = vsel %vm474, %v887, 0.0
        %v890 = vsel %vm475, %v881, 0.0
        %v891 = vsel %vm474, %v888, 0.0
        %v892 = vsel %vm475, %v882, 0.0
        %893 = vrot.lane.b32.xlu0 %v864, 16
        %v894 = vpop.permute.xlu0 %893
        %895 = vrot.lane.b32.xlu0 %v866, 16
        %v896 = vpop.permute.xlu0 %895
        %899 = vrot.lane.b32.xlu0 %v863, 16
        %v900 = vpop.permute.xlu0 %899
        %901 = vrot.lane.b32.xlu0 %v865, 16
        %v902 = vpop.permute.xlu0 %901
        %v903 = vsel %vm490, %v900, %v894
        %v904 = vsel %vm490, %v902, %v896
        %v909 = vsel %vm490, %v894, %v900
        %v910 = vsel %vm490, %v896, %v902
        %v911 = vsel %vm512, %v909, 0.0
        %v912 = vsel %vm513, %v903, 0.0
        %v913 = vsel %vm512, %v910, 0.0
        %v914 = vsel %vm513, %v904, 0.0
        %915 = vrot.lane.b32.xlu0 %v864, 15
        %v916 = vpop.permute.xlu0 %915
        %917 = vrot.lane.b32.xlu0 %v866, 15
        %v918 = vpop.permute.xlu0 %917
        %921 = vrot.lane.b32.xlu0 %v863, 15
        %v922 = vpop.permute.xlu0 %921
        %923 = vrot.lane.b32.xlu0 %v865, 15
        %v924 = vpop.permute.xlu0 %923
        %v925 = vsel %vm528, %v922, %v916
        %v926 = vsel %vm528, %v924, %v918
        %v931 = vsel %vm528, %v916, %v922
        %v932 = vsel %vm528, %v918, %v924
        %v933 = vsel %vm551, %v931, 0.0
        %v934 = vsel %vm552, %v925, 0.0
        %v935 = vsel %vm551, %v932, 0.0
        %v936 = vsel %vm552, %v926, 0.0
        %937 = vrot.lane.b32.xlu0 %v864, 1
        %v938 = vpop.permute.xlu0 %937
        %939 = vrot.lane.b32.xlu0 %v866, 1
        %v940 = vpop.permute.xlu0 %939
        %943 = vrot.lane.b32.xlu0 %v863, 1
        %v944 = vpop.permute.xlu0 %943
        %945 = vrot.lane.b32.xlu0 %v865, 1
        %v946 = vpop.permute.xlu0 %945
        %v947 = vsel %vm567, %v944, %v938
        %v948 = vsel %vm567, %v946, %v940
        %v953 = vsel %vm567, %v938, %v944
        %v954 = vsel %vm567, %v940, %v946
        %v955 = vsel %vm590, %v953, 0.0
        %v956 = vsel %vm591, %v947, 0.0
        %v957 = vsel %vm590, %v954, 0.0
        %v958 = vsel %vm591, %v948, 0.0
        %959 = vrot.lane.b32.xlu0 %v863, 127
        %v960 = vpop.permute.xlu0 %959
        %961 = vrot.lane.b32.xlu0 %v864, 127
        %v962 = vpop.permute.xlu0 %961
        %963 = vrot.lane.b32.xlu0 %v865, 127
        %v964 = vpop.permute.xlu0 %963
        %965 = vrot.lane.b32.xlu0 %v866, 127
        %v966 = vpop.permute.xlu0 %965
        %v967 = vsel %vm604, %v960, %v962
        %v968 = vsel %vm604, %v964, %v966
        %v975 = vsel %vm604, %v962, %v960
        %v976 = vsel %vm604, %v966, %v964
        %v977 = vsel %vm626, %v967, 0.0
        %v978 = vsel %vm627, %v975, 0.0
        %v979 = vsel %vm626, %v968, 0.0
        %v980 = vsel %vm627, %v976, 0.0
        %981 = vrot.lane.b32.xlu0 %v863, 113
        %v982 = vpop.permute.xlu0 %981
        %983 = vrot.lane.b32.xlu0 %v864, 113
        %v984 = vpop.permute.xlu0 %983
        %985 = vrot.lane.b32.xlu0 %v865, 113
        %v986 = vpop.permute.xlu0 %985
        %987 = vrot.lane.b32.xlu0 %v866, 113
        %v988 = vpop.permute.xlu0 %987
        %v989 = vsel %vm640, %v982, %v984
        %v990 = vsel %vm640, %v986, %v988
        %v997 = vsel %vm640, %v984, %v982
        %v998 = vsel %vm640, %v988, %v986
        %v999 = vsel %vm666, %v989, 0.0
        %v1000 = vsel %vm667, %v997, 0.0
        %v1001 = vsel %vm666, %v990, 0.0
        %v1002 = vsel %vm667, %v998, 0.0
        %1003 = vrot.lane.b32.xlu0 %v863, 112
        %v1004 = vpop.permute.xlu0 %1003
        %1005 = vrot.lane.b32.xlu0 %v864, 112
        %v1006 = vpop.permute.xlu0 %1005
        %1007 = vrot.lane.b32.xlu0 %v865, 112
        %v1008 = vpop.permute.xlu0 %1007
        %1009 = vrot.lane.b32.xlu0 %v866, 112
        %v1010 = vpop.permute.xlu0 %1009
        %v1011 = vsel %vm680, %v1004, %v1006
        %v1012 = vsel %vm680, %v1008, %v1010
        %v1019 = vsel %vm680, %v1006, %v1004
        %v1020 = vsel %vm680, %v1010, %v1008
        %v1021 = vsel %vm702, %v1011, 0.0
        %v1022 = vsel %vm703, %v1019, 0.0
        %v1023 = vsel %vm702, %v1012, 0.0
        %v1024 = vsel %vm703, %v1020, 0.0
        %1025 = vrot.lane.b32.xlu0 %v863, 111
        %v1026 = vpop.permute.xlu0 %1025
        %1027 = vrot.lane.b32.xlu0 %v864, 111
        %v1028 = vpop.permute.xlu0 %1027
        %1029 = vrot.lane.b32.xlu0 %v865, 111
        %v1030 = vpop.permute.xlu0 %1029
        %1031 = vrot.lane.b32.xlu0 %v866, 111
        %v1032 = vpop.permute.xlu0 %1031
        %v1033 = vsel %vm716, %v1026, %v1028
        %v1034 = vsel %vm716, %v1030, %v1032
        %v1041 = vsel %vm716, %v1028, %v1026
        %v1042 = vsel %vm716, %v1032, %v1030
        %v1043 = vsel %vm738, %v1033, 0.0
        %v1044 = vsel %vm739, %v1041, 0.0
        %v1045 = vsel %vm738, %v1034, 0.0
        %v1046 = vsel %vm739, %v1042, 0.0
        %v1047 = vld [vmem:[#allocation6] sm:$0xff]
        %v1048 = vld [vmem:[#allocation6 + $0x8] sm:$0xff]
        %v1049 = vld [vmem:[#allocation6 + $0x10] sm:$0xff]
        %v1050 = vld [vmem:[#allocation6 + $0x18] sm:$0xff]
        %v1052 = vsel %vm490, %v1048, 0
        %v1055 = vsel %vm490, %v1050, 0
        %1057 = vmatprep.subr.mxu0 %v890
        %1058 = vmatpush1.msra.mxu0 %v889
        %1059 = vmatprep.subr.mxu0 %v892
        %1060 = vmatpush1.msra.mxu0 %v891
        %1061 = vmatprep.subr.mxu0 %v912
        %1062 = vmatpush1.msra.mxu0 %v911
        %1063 = vmatprep.subr.mxu0 %v914
        %1064 = vmatpush1.msra.mxu0 %v913
        %1065 = vmatprep.subr.mxu0 %v934
        %1066 = vmatpush1.msra.mxu0 %v933
        %1067 = vmatprep.subr.mxu0 %v936
        %1068 = vmatpush1.msra.mxu0 %v935
        %1069 = vmatprep.subr.mxu0 %v956
        %1070 = vmatpush1.msra.mxu0 %v955
        %1071 = vmatprep.subr.mxu0 %v958
        %1072 = vmatpush1.msra.mxu0 %v957
        %1073 = vmatprep.subr.mxu0 %v864
        %1074 = vmatpush1.msra.mxu0 %v863
        %1075 = vmatprep.subr.mxu0 %v866
        %1076 = vmatpush1.msra.mxu0 %v865
        %1077 = vmatprep.subr.mxu0 %v978
        %1078 = vmatpush1.msra.mxu0 %v977
        %1079 = vmatprep.subr.mxu0 %v980
        %1080 = vmatpush1.msra.mxu0 %v979
        %1081 = vmatprep.subr.mxu0 %v1000
        %1082 = vmatpush1.msra.mxu0 %v999
        %1083 = vmatprep.subr.mxu0 %v1002
        %1084 = vmatpush1.msra.mxu0 %v1001
        %1085 = vmatprep.subr.mxu0 %v1022
        %1086 = vmatpush1.msra.mxu0 %v1021
        %1087 = vmatprep.subr.mxu0 %v1024
        %1088 = vmatpush1.msra.mxu0 %v1023
        %1089 = vmatprep.subr.mxu0 %v1044
        %1090 = vmatpush1.msra.mxu0 %v1043
        %1091 = vmatprep.subr.mxu0 %v1046
        %1092 = vmatpush1.msra.mxu0 %v1045
        %1093 = vmatprep.subr.mxu0 0.0
        %1094 = vmatpush1.msra.mxu0 0.0
        %1095 = vmatprep.subr.mxu0 0.0
        %1096 = vmatpush1.msra.mxu0 0.0
        %1097 = vmatprep.subr.mxu0 0.0
        %1098 = vmatpush1.msra.mxu0 0.0
        %1099 = vmatprep.subr.mxu0 0.0
        %1100 = vmatpush1.msra.mxu0 0.0
        %1101 = vmatprep.subr.mxu0 0.0
        %1102 = vmatpush1.msra.mxu0 0.0
        %1103 = vmatprep.subr.mxu0 0.0
        %1104 = vmatpush1.msra.mxu0 0.0
        %1105 = vmatprep.subr.mxu0 0.0
        %1106 = vmatpush1.msra.mxu0 0.0
        %1107 = vmatprep.subr.mxu0 0.0
        %1108 = vmatpush1.msra.mxu0 0.0
        %1109 = vmatprep.subr.mxu0 0.0
        %1110 = vmatpush1.msra.mxu0 0.0
        %1111 = vmatprep.subr.mxu0 0.0
        %1112 = vmatpush1.msra.mxu0 0.0
        %1113 = vmatprep.subr.mxu0 0.0
        %1114 = vmatpush1.msra.mxu0 0.0
        %1115 = vmatprep.subr.mxu0 0.0
        %1116 = vmatpush1.msra.mxu0 0.0
        %1117 = vmatprep.subr.mxu0 0.0
        %1118 = vmatpush1.msra.mxu0 0.0
        %1119 = vmatprep.subr.mxu0 0.0
        %1120 = vmatpush1.msra.mxu0 0.0
        %1121 = vmatprep.mubr.f32.mxu0 %v1052
        %1122 = vmatmul.mubr.f32.gmra.mrb[0].mxu0 %v1047
        %v1123 = vpop.f32.mrb[0].mxu0
        %v1124 = vadd.f32 0.0, %v1123
        %v1125 = vpop.f32.mrb[0].mxu0
        %v1126 = vadd.f32 0.0, %v1125
        %1127 = vmatprep.mubr.f32.mxu0 %v1055
        %1128 = vmatmul.mubr.f32.gmra.mrb[0].mxu0 %v1049
        %v1129 = vpop.f32.mrb[0].mxu0
        %v1130 = vadd.f32 0.0, %v1129
        %v1131 = vpop.f32.mrb[0].mxu0
        %v1132 = vadd.f32 0.0, %v1131
        %1133 = vdwg.mxu0
        %v1134 = vld [vmem:[%s7] sm:$0xff]
        %v1135 = vld [vmem:[%s7 + $0x8] sm:$0xff]
        %1137 = vset.pattern.permute.xlu0 0
        %1138 = vperm.xlu0 %1137, %v1134
        %v1139 = vpop.permute.xlu0 %1138
        %1142 = vset.pattern.permute.xlu0 0
        %1143 = vperm.xlu0 %1142, %v1135
        %v1144 = vpop.permute.xlu0 %1143
        %v1146 = vmul.f32 %v1124, %v1139
        %v1147 = vmul.f32 %v1126, %v1139
        %v1148 = vmul.f32 %v1130, %v1144
        %v1149 = vmul.f32 %v1132, %v1144
        %v1150 = vld [vmem:[%s8] sm:$0xff]
        %v1151 = vld [vmem:[%s8 + $0x8] sm:$0xff]
        %1153 = vset.pattern.permute.xlu0 0
        %1154 = vperm.xlu0 %1153, %v1150
        %v1155 = vpop.permute.xlu0 %1154
        %1158 = vset.pattern.permute.xlu0 0
        %1159 = vperm.xlu0 %1158, %v1151
        %v1160 = vpop.permute.xlu0 %1159
        %v1162 = vadd.f32 %v1146, %v1155
        %v1163 = vadd.f32 %v1147, %v1155
        %v1164 = vadd.f32 %v1148, %v1160
        %v1165 = vadd.f32 %v1149, %v1160
        %v1166 = vadd.f32 %v1162, %v427
        %v1167 = vadd.f32 %v1163, %v428
        %v1168 = vadd.f32 %v1164, %v429
        %v1169 = vadd.f32 %v1165, %v430
        %v1170 = vmax.f32 %v1166, 0.0
        %v1171 = vmax.f32 %v1167, 0.0
        %v1172 = vmax.f32 %v1168, 0.0
        %v1173 = vmax.f32 %v1169, 0.0
        %1174 = vst [vmem:[%s414] sm:$0xff] %v1170
        %1175 = vst [vmem:[%s414 + $0x8] sm:$0xff] %v1171
        %1176 = vst [vmem:[%s414 + $0x10] sm:$0xff] %v1172
        %1177 = vst [vmem:[%s414 + $0x18] sm:$0xff] %v1173
        %s1178 = sand.u32 %s237, 1
        %s1179 = scalar_lea.sflag [#allocation5], %s1178
        %s1180 = sand.u32 %s237, 1
        %s1181 = smul.addr %s1180, 32
        %s1182 = scalar_lea.vmem [#allocation8], %s1181
        // Predicated region
        $region88: #{tpu_custom_call.1} parent=74 // pred_check
          %p1183 = pneg %p247
        $region89: #{tpu_custom_call.1} parent=74 // pred_check_branch
          %1185 = sbr.rel (%p1183) target = $region91
        $region90: #{tpu_custom_call.1} parent=74 // pred_region
          %s1186 = smul.u32 2, %s25
          %s1188 = ssub.s32 512, 512
          %1189 = vsyncadd %s1179, %s1188
          %s1190 = smul.addr %s1186, 128
          %s1191 = scalar_lea.hbm %s9, %s1190
          %s1192 = sshll.u32 %s1182, 4
          %s1193 = int_to_ptr.vmem [resolvable:$true] %s1192
          %1198 = dma.vmem_to_hbm [thread:$0]  %s1193, 512, %s1191, %s1179, 256, 512, 16
        $region91: #{tpu_custom_call.1} parent=74 // pred_fallthru
          _
      $region75: #{tpu_custom_call.1} parent=5 // pred_fallthru
        _
      %p1199 = scmp.le.s32.totalorder 2, %s20
      // Predicated region
      $region92: #{tpu_custom_call.1} parent=5 // pred_check
        %p1200 = pneg %p1199
      $region93: #{tpu_custom_call.1} parent=5 // pred_check_branch
        %1202 = sbr.rel (%p1200) target = $region95
      $region94: #{tpu_custom_call.1} parent=5 // pred_region
        %s1203 = ssub.s32 %s20, 2
        // Predicated region
        $region96: #{tpu_custom_call.1} parent=94 // pred_check
          %p1204 = pneg %p253
        $region97: #{tpu_custom_call.1} parent=94 // pred_check_branch
          %1206 = sbr.rel (%p1204) target = $region99
        $region98: #{tpu_custom_call.1} parent=94 // pred_region
          %s1207 = sand.u32 %s238, 1
          %s1208 = scalar_lea.sflag [#allocation5], %s1207
          %s1209 = sand.u32 %s238, 1
          %s1210 = smul.addr %s1209, 32
          %s1211 = scalar_lea.vmem [#allocation8], %s1210
          %1212 = dma.done %s1208, 512
        $region99: #{tpu_custom_call.1} parent=94 // pred_fallthru
          _
      $region95: #{tpu_custom_call.1} parent=5 // pred_fallthru
        _
    $region6: #{tpu_custom_call.1} parent=1 // loop_footer
      %s24 = sadd.s32 1, %s20
    $region7: #{tpu_custom_call.1} parent=1 // loop_footer_branch
      %19 = sbr.rel target = $region3
    $region8: #{tpu_custom_call.1} parent=1 // loop_exit
      _
    %1213 = vsyncpa [#allocation4], 1
    %s1214 = scalar_lea.sflag [#allocation4], 1
    %1215 = vsyncpa %s1214, 1
    %1216 = vsyncpa [#allocation7], 1
    %1217 = vsyncpa [#allocation5], 1
    %s1218 = scalar_lea.sflag [#allocation5], 1
    %1219 = vsyncpa %s1218, 1

</llo_original>
